<compile_context>
chip_gen: v7x
topology: tpu7x:2x2x1
jax: 0.10.0
libtpu: 0.0.40
codegen_flags: <defaults>
</compile_context>

<pallas_src>
import functools

import jax
import jax.numpy as jnp
import numpy as np
from jax import lax
from jax.experimental import pallas as pl
from jax.experimental.pallas import tpu as pltpu

BN_EPS = 1e-5
# f32 keeps the kernel comparable (1e-4) to the f32 XLA reference.  Set to
# jnp.bfloat16 on v5e/v6e/v7x (no/slow f32 MXU path) for ~2x throughput.
MATMUL_DTYPE = jnp.float32


def _banded_conv_weights_per_dy(w_oihw, width):
  """(O, I, 3, 3) OIHW conv taps -> per-dy banded slabs (3, width*I, width*O).

  W-direction zero padding is folded into the weight:
    slab[dy, win*I + i, wout*O + o] = w[o, i, dy, win - wout + 1]
  when that tap index lies in [0, 2], else 0.  The matching LHS for slab dy is
  the dy-shifted row band of the *H-padded only* activation, reshaped to
  (N*H, width*I) — no W padding and no band concatenation needed in-kernel.
  """
  o_ch, i_ch, kh, kw = w_oihw.shape
  w_t = jnp.transpose(w_oihw, (2, 3, 1, 0)).astype(jnp.float32)   # (dy, dx, i, o)
  win = jnp.arange(width)[None, :, None]
  wout = jnp.arange(width)[None, None, :]
  dx = jnp.arange(kw)[:, None, None]
  # mask[dx, win, wout] = 1  iff  win == wout + dx - 1  (pad=1 conv band)
  mask = (win == wout + dx - 1).astype(jnp.float32)               # (dx, win, wout)
  banded = jnp.einsum("yxio,xpw->ypiwo", w_t, mask)               # (dy, win, i, wout, o)
  return banded.reshape(kh, width * i_ch, width * o_ch)


def _residual_block_kernel(
    x_ref,        # (N, H, W*Cin)            f32, unpadded input rows
    w1_ref,       # (3, W*Cin,  W*Cout)      per-dy banded conv1 weights
    w2_ref,       # (3, W*Cout, W*Cout)      per-dy banded conv2 weights
    g1_ref,       # (1, Cout)  BN1 gamma
    be1_ref,      # (1, Cout)  BN1 beta
    g2_ref,       # (1, Cout)  BN2 gamma
    be2_ref,      # (1, Cout)  BN2 beta
    out_ref,      # (N*H, W*Cout)            lane-dense output slab
    xpad_ref,     # scratch (N, H+2, W*Cin)  f32 (H padding only)
    h1pad_ref,    # scratch (N, H+2, W*Cout) f32 (H padding only)
    *, N, H, W, Cin, Cout,
):
  L = W * Cout
  inv_m = 1.0 / float(N * H * W)
  mm_dtype = w1_ref.dtype

  # 0/1 selection matrix generated in-kernel (no HBM input / DMA):
  # sel[q, c] = (q % Cout == c) -- collapses the W lane groups per channel via
  # a tiny matmul (MXU slot is free in this layout/store-bound kernel).
  sel = (lax.broadcasted_iota(jnp.int32, (L, Cout), 0) % Cout
         == lax.broadcasted_iota(jnp.int32, (L, Cout), 1)).astype(jnp.float32)

  def conv3x3(pad_ref, w_ref, k_in):
    """3x3 / stride 1 / pad 1 conv as 3 accumulating MXU matmuls (one per dy)."""
    acc = jnp.zeros((N * H, L), jnp.float32)
    for dy in range(3):                              # static unroll
      band = pad_ref[:, dy:dy + H, :].reshape(N * H, k_in).astype(mm_dtype)
      acc = acc + jnp.dot(band, w_ref[dy], preferred_element_type=jnp.float32)
    return acc

  def bn_scale_shift(y, g_ref, be_ref):
    """Training-mode batch stats -> per-column (1, L) scale & shift."""
    ssum = jnp.sum(y, axis=0, keepdims=True)          # (1, L) row reduce (XLU)
    ssq = jnp.sum(y * y, axis=0, keepdims=True)       # (1, L)
    stats = jnp.concatenate([ssum, ssq], axis=0)      # (2, L) sublane concat
    red = jnp.dot(stats, sel, preferred_element_type=jnp.float32) * inv_m  # (2, Cout)
    mean = red[0:1, :]
    ex2 = red[1:2, :]
    # One-pass E[x^2] - mean^2; clamp guards f32 cancellation at this scale.
    var = jnp.maximum(ex2 - mean * mean, 0.0)
    sc = g_ref[...] * lax.rsqrt(var + BN_EPS)
    sh = be_ref[...] - mean * sc
    return jnp.tile(sc, (1, W)), jnp.tile(sh, (1, W))

  # ---- H-pad input in VMEM (W padding lives in the banded weights) ----------
  xpad_ref[:, 0:1, :] = jnp.zeros((N, 1, W * Cin), jnp.float32)
  xpad_ref[:, H + 1:H + 2, :] = jnp.zeros((N, 1, W * Cin), jnp.float32)
  xpad_ref[:, 1:H + 1, :] = x_ref[...]               # lane-aligned, full width

  # ---- Conv1 + BN1 + ReLU -----------------------------------------------------
  y1 = conv3x3(xpad_ref, w1_ref, W * Cin)
  sc1, sh1 = bn_scale_shift(y1, g1_ref, be1_ref)
  h1 = jnp.maximum(y1 * sc1 + sh1, 0.0)              # (N*H, L)

  # ---- H-pad h1 for conv2 (last dim L = 128 at test shape -> unmasked vst) ---
  h1pad_ref[:, 0:1, :] = jnp.zeros((N, 1, L), jnp.float32)
  h1pad_ref[:, H + 1:H + 2, :] = jnp.zeros((N, 1, L), jnp.float32)
  h1pad_ref[:, 1:H + 1, :] = h1.reshape(N, H, L)

  # ---- Conv2 + BN2 + final ReLU (downsample=None -> no residual add) ---------
  y2 = conv3x3(h1pad_ref, w2_ref, L)
  sc2, sh2 = bn_scale_shift(y2, g2_ref, be2_ref)
  out_ref[...] = jnp.maximum(y2 * sc2 + sh2, 0.0)


def residual_block_forward(x_nchw, params):
  """Pallas forward. x_nchw: (N, Cin, H, W) float32 -> (N, Cout, H, W)."""
  N, Cin, H, W = x_nchw.shape
  Cout = params["w1"].shape[0]
  L = W * Cout
  # Note: unmasked output stores require L % 128 == 0 (true for 16x8 test
  # shape); other shapes still run correctly, just with masked stores.

  # NCHW -> lane-dense rows (N, H, W*Cin).  Layout plumbing only (XLA side).
  x_rows = jnp.transpose(x_nchw, (0, 2, 3, 1)).astype(jnp.float32).reshape(N, H, W * Cin)

  # Per-dy banded conv weights with W padding folded in.  Conv biases are
  # omitted on purpose: a per-channel bias is exactly cancelled by the
  # BatchNorm mean subtraction that immediately follows each conv.
  w1b = _banded_conv_weights_per_dy(params["w1"], W).astype(MATMUL_DTYPE)
  w2b = _banded_conv_weights_per_dy(params["w2"], W).astype(MATMUL_DTYPE)
  g1 = params["gamma1"].reshape(1, Cout).astype(jnp.float32)
  be1 = params["beta1"].reshape(1, Cout).astype(jnp.float32)
  g2 = params["gamma2"].reshape(1, Cout).astype(jnp.float32)
  be2 = params["beta2"].reshape(1, Cout).astype(jnp.float32)

  kernel = functools.partial(
      _residual_block_kernel, N=N, H=H, W=W, Cin=Cin, Cout=Cout)

  vmem = pl.BlockSpec(memory_space=pltpu.MemorySpace.VMEM)
  out2d = pl.pallas_call(
      kernel,
      out_shape=jax.ShapeDtypeStruct((N * H, L), jnp.float32),
      in_specs=[vmem] * 7,
      out_specs=vmem,
      scratch_shapes=[
          pltpu.VMEM((N, H + 2, W * Cin), jnp.float32),    # H-padded input
          pltpu.VMEM((N, H + 2, L), jnp.float32),          # H-padded h1
      ],
      # Toy shape needs <1 MiB; re-derive per generation (<=~48 MiB on v7x)
      # once the row-band grid + double-buffered tiling is added.
      compiler_params=pltpu.CompilerParams(vmem_limit_bytes=16 * 1024 * 1024),
  )(x_rows, w1b, w2b, g1, be1, g2, be2)

  # (N*H, W*Cout) -> NCHW to match the PyTorch convention.
  return jnp.transpose(out2d.reshape(N, H, W, Cout), (0, 3, 1, 2))


def _reference_forward(x_nchw, params):
  """Pure-JAX (XLA) reference of the same forward (keeps the conv biases)."""
  def conv(x, w, b):
    y = lax.conv_general_dilated(
        x, w, window_strides=(1, 1), padding="SAME",
        dimension_numbers=("NCHW", "OIHW", "NCHW"))
    return y + b[None, :, None, None]

  def bn(y, gamma, beta):
    mean = jnp.mean(y, axis=(0, 2, 3), keepdims=True)
    var = jnp.mean((y - mean) ** 2, axis=(0, 2, 3), keepdims=True)
    return ((y - mean) * lax.rsqrt(var + BN_EPS)
            * gamma[None, :, None, None] + beta[None, :, None, None])

  h = jnp.maximum(bn(conv(x_nchw, params["w1"], params["b1"]),
                     params["gamma1"], params["beta1"]), 0.0)
  h = bn(conv(h, params["w2"], params["b2"]),
         params["gamma2"], params["beta2"])
  return jnp.maximum(h, 0.0)


def init_params(key, in_channels, out_channels):
  k1, k2, k3, k4 = jax.random.split(key, 4)
  fan1 = in_channels * 9
  fan2 = out_channels * 9
  return {
      "w1": jax.random.normal(k1, (out_channels, in_channels, 3, 3),
                              jnp.float32) / np.sqrt(fan1),
      "b1": jax.random.normal(k2, (out_channels,), jnp.float32) * 0.01,
      "gamma1": jnp.ones((out_channels,), jnp.float32),
      "beta1": jnp.zeros((out_channels,), jnp.float32),
      "w2": jax.random.normal(k3, (out_channels, out_channels, 3, 3),
                              jnp.float32) / np.sqrt(fan2),
      "b2": jax.random.normal(k4, (out_channels,), jnp.float32) * 0.01,
      "gamma2": jnp.ones((out_channels,), jnp.float32),
      "beta2": jnp.zeros((out_channels,), jnp.float32),
  }


if __name__ == "__main__":
  key = jax.random.PRNGKey(0)
  kx, kp = jax.random.split(key)

  N, Cin, H, W = 2, 4, 16, 16
  Cout = 8

  x = jax.random.normal(kx, (N, Cin, H, W), jnp.float32)   # NCHW like PyTorch
  params = init_params(kp, Cin, Cout)

  out = jax.block_until_ready(residual_block_forward(x, params))
  ref = jax.block_until_ready(_reference_forward(x, params))

  assert out.shape == (N, Cout, H, W), out.shape
  np.testing.assert_allclose(np.asarray(out), np.asarray(ref),
                             rtol=1e-4, atol=1e-4)
  print("KERNEL_OK")
</pallas_src>

<mosaic_0001>
module attributes {stable_mosaic.version = 11 : i64} {
  func.func @_residual_block_kernel(%arg0: memref<2x16x64xf32, #tpu.memory_space<vmem>>, %arg1: memref<3x64x128xf32, #tpu.memory_space<vmem>>, %arg2: memref<3x128x128xf32, #tpu.memory_space<vmem>>, %arg3: memref<1x8xf32, #tpu.memory_space<vmem>>, %arg4: memref<1x8xf32, #tpu.memory_space<vmem>>, %arg5: memref<1x8xf32, #tpu.memory_space<vmem>>, %arg6: memref<1x8xf32, #tpu.memory_space<vmem>>, %arg7: memref<32x128xf32, #tpu.memory_space<vmem>>, %arg8: memref<2x18x64xf32, #tpu.memory_space<vmem>>, %arg9: memref<2x18x128xf32, #tpu.memory_space<vmem>>) attributes {dimension_semantics = [], scalar_prefetch = 0 : i64, scratch_operands = 2 : i64, tpu.core_type = #tpu.core_type<tc>} {
    %0 = tpu.iota {dimensions = array<i32: 0>} : vector<128x8xi32>
    %c8_i32 = arith.constant 8 : i32
    %c0_i32 = arith.constant 0 : i32
    %1 = arith.cmpi eq, %c8_i32, %c0_i32 : i32
    %c1_i32 = arith.constant 1 : i32
    %2 = arith.select %1, %c1_i32, %c8_i32 : i32
    %3 = vector.broadcast %2 : i32 to vector<128x8xi32>
    %4 = arith.remsi %0, %3 : vector<128x8xi32>
    %c0_i32_0 = arith.constant 0 : i32
    %5 = vector.broadcast %c0_i32_0 : i32 to vector<128x8xi32>
    %6 = arith.cmpi ne, %4, %5 : vector<128x8xi32>
    %c0_i32_1 = arith.constant 0 : i32
    %7 = vector.broadcast %c0_i32_1 : i32 to vector<128x8xi32>
    %8 = arith.cmpi slt, %4, %7 : vector<128x8xi32>
    %c0_i32_2 = arith.constant 0 : i32
    %9 = arith.cmpi slt, %2, %c0_i32_2 : i32
    %10 = vector.broadcast %9 : i1 to vector<128x8xi1>
    %11 = vector.broadcast %10 : vector<128x8xi1> to vector<128x8xi1>
    %12 = arith.xori %8, %11 : vector<128x8xi1>
    %13 = arith.andi %12, %6 : vector<128x8xi1>
    %14 = vector.broadcast %2 : i32 to vector<128x8xi32>
    %15 = arith.addi %4, %14 : vector<128x8xi32>
    %16 = arith.select %13, %15, %4 : vector<128x8xi1>, vector<128x8xi32>
    %17 = tpu.iota {dimensions = array<i32: 1>} : vector<128x8xi32>
    %18 = arith.cmpi eq, %16, %17 : vector<128x8xi32>
    %19 = arith.extui %18 : vector<128x8xi1> to vector<128x8xi32>
    %20 = arith.sitofp %19 : vector<128x8xi32> to vector<128x8xf32>
    %cst = arith.constant 0.000000e+00 : f32
    %21 = vector.broadcast %cst : f32 to vector<2x1x64xf32>
    %c0 = arith.constant 0 : index
    %c0_3 = arith.constant 0 : index
    %c0_4 = arith.constant 0 : index
    %22 = vector.load %arg8[%c0, %c0_3, %c0_4] : memref<2x18x64xf32, #tpu.memory_space<vmem>>, vector<2x1x64xf32>
    tpu.vector_store %arg8[%c0, %c0_3, %c0_4], %21 {strides = array<i32>} : memref<2x18x64xf32, #tpu.memory_space<vmem>>, vector<2x1x64xf32>,
    %cst_5 = arith.constant 0.000000e+00 : f32
    %23 = vector.broadcast %cst_5 : f32 to vector<2x1x64xf32>
    %c0_6 = arith.constant 0 : index
    %c17 = arith.constant 17 : index
    %c0_7 = arith.constant 0 : index
    %24 = vector.load %arg8[%c0_6, %c17, %c0_7] : memref<2x18x64xf32, #tpu.memory_space<vmem>>, vector<2x1x64xf32>
    tpu.vector_store %arg8[%c0_6, %c17, %c0_7], %23 {strides = array<i32>} : memref<2x18x64xf32, #tpu.memory_space<vmem>>, vector<2x1x64xf32>,
    %c0_8 = arith.constant 0 : index
    %c0_9 = arith.constant 0 : index
    %c0_10 = arith.constant 0 : index
    %25 = vector.load %arg0[%c0_8, %c0_9, %c0_10] : memref<2x16x64xf32, #tpu.memory_space<vmem>>, vector<2x16x64xf32>
    %c0_11 = arith.constant 0 : index
    %c1 = arith.constant 1 : index
    %c0_12 = arith.constant 0 : index
    %26 = vector.load %arg8[%c0_11, %c1, %c0_12] : memref<2x18x64xf32, #tpu.memory_space<vmem>>, vector<2x16x64xf32>
    tpu.vector_store %arg8[%c0_11, %c1, %c0_12], %25 {strides = array<i32>} : memref<2x18x64xf32, #tpu.memory_space<vmem>>, vector<2x16x64xf32>,
    %cst_13 = arith.constant 0.000000e+00 : f32
    %27 = vector.broadcast %cst_13 : f32 to vector<32x128xf32>
    %c0_14 = arith.constant 0 : index
    %c0_15 = arith.constant 0 : index
    %c0_16 = arith.constant 0 : index
    %28 = vector.load %arg8[%c0_14, %c0_15, %c0_16] : memref<2x18x64xf32, #tpu.memory_space<vmem>>, vector<2x16x64xf32>
    %29 = vector.shape_cast %28 : vector<2x16x64xf32> to vector<32x64xf32>
    %c0_17 = arith.constant 0 : index
    %c0_18 = arith.constant 0 : index
    %c0_19 = arith.constant 0 : index
    %30 = vector.load %arg1[%c0_17, %c0_18, %c0_19] : memref<3x64x128xf32, #tpu.memory_space<vmem>>, vector<1x64x128xf32>
    %31 = vector.shape_cast %30 : vector<1x64x128xf32> to vector<64x128xf32>
    %cst_20 = arith.constant dense<0.000000e+00> : vector<32x128xf32>
    %32 = tpu.matmul %29, %31, %cst_20 {dimension_numbers = #tpu.dot_dimension_numbers<[1], [0], [0], [1], [0, 0, 1, 1], [], []>} : vector<32x64xf32>, vector<64x128xf32>, vector<32x128xf32> -> vector<32x128xf32>
    %33 = arith.addf %27, %32 : vector<32x128xf32>
    %c0_21 = arith.constant 0 : index
    %c1_22 = arith.constant 1 : index
    %c0_23 = arith.constant 0 : index
    %34 = vector.load %arg8[%c0_21, %c1_22, %c0_23] : memref<2x18x64xf32, #tpu.memory_space<vmem>>, vector<2x16x64xf32>
    %35 = vector.shape_cast %34 : vector<2x16x64xf32> to vector<32x64xf32>
    %c1_24 = arith.constant 1 : index
    %c0_25 = arith.constant 0 : index
    %c0_26 = arith.constant 0 : index
    %36 = vector.load %arg1[%c1_24, %c0_25, %c0_26] : memref<3x64x128xf32, #tpu.memory_space<vmem>>, vector<1x64x128xf32>
    %37 = vector.shape_cast %36 : vector<1x64x128xf32> to vector<64x128xf32>
    %cst_27 = arith.constant dense<0.000000e+00> : vector<32x128xf32>
    %38 = tpu.matmul %35, %37, %cst_27 {dimension_numbers = #tpu.dot_dimension_numbers<[1], [0], [0], [1], [0, 0, 1, 1], [], []>} : vector<32x64xf32>, vector<64x128xf32>, vector<32x128xf32> -> vector<32x128xf32>
    %39 = arith.addf %33, %38 : vector<32x128xf32>
    %c0_28 = arith.constant 0 : index
    %c2 = arith.constant 2 : index
    %c0_29 = arith.constant 0 : index
    %40 = vector.load %arg8[%c0_28, %c2, %c0_29] : memref<2x18x64xf32, #tpu.memory_space<vmem>>, vector<2x16x64xf32>
    %41 = vector.shape_cast %40 : vector<2x16x64xf32> to vector<32x64xf32>
    %c2_30 = arith.constant 2 : index
    %c0_31 = arith.constant 0 : index
    %c0_32 = arith.constant 0 : index
    %42 = vector.load %arg1[%c2_30, %c0_31, %c0_32] : memref<3x64x128xf32, #tpu.memory_space<vmem>>, vector<1x64x128xf32>
    %43 = vector.shape_cast %42 : vector<1x64x128xf32> to vector<64x128xf32>
    %cst_33 = arith.constant dense<0.000000e+00> : vector<32x128xf32>
    %44 = tpu.matmul %41, %43, %cst_33 {dimension_numbers = #tpu.dot_dimension_numbers<[1], [0], [0], [1], [0, 0, 1, 1], [], []>} : vector<32x64xf32>, vector<64x128xf32>, vector<32x128xf32> -> vector<32x128xf32>
    %45 = arith.addf %39, %44 : vector<32x128xf32>
    %cst_34 = arith.constant dense<0.000000e+00> : vector<128xf32>
    %46 = vector.multi_reduction <add>, %45, %cst_34 [0] : vector<32x128xf32> to vector<128xf32>
    %47 = vector.shape_cast %46 : vector<128xf32> to vector<1x128xf32>
    %48 = arith.mulf %45, %45 : vector<32x128xf32>
    %cst_35 = arith.constant dense<0.000000e+00> : vector<128xf32>
    %49 = vector.multi_reduction <add>, %48, %cst_35 [0] : vector<32x128xf32> to vector<128xf32>
    %50 = vector.shape_cast %49 : vector<128xf32> to vector<1x128xf32>
    %51 = tpu.concatenate %47, %50 in 0 : vector<1x128xf32>, vector<1x128xf32> -> vector<2x128xf32>
    %cst_36 = arith.constant dense<0.000000e+00> : vector<2x8xf32>
    %52 = tpu.matmul %51, %20, %cst_36 {dimension_numbers = #tpu.dot_dimension_numbers<[1], [0], [0], [1], [0, 0, 1, 1], [], []>} : vector<2x128xf32>, vector<128x8xf32>, vector<2x8xf32> -> vector<2x8xf32>
    %cst_37 = arith.constant 0.001953125 : f32
    %53 = vector.broadcast %cst_37 : f32 to vector<2x8xf32>
    %54 = arith.mulf %52, %53 : vector<2x8xf32>
    %55 = vector.extract_strided_slice %54 {offsets = [0, 0], sizes = [1, 8], strides = [1, 1]} : vector<2x8xf32> to vector<1x8xf32>
    %56 = vector.extract_strided_slice %54 {offsets = [1, 0], sizes = [1, 8], strides = [1, 1]} : vector<2x8xf32> to vector<1x8xf32>
    %57 = arith.mulf %55, %55 : vector<1x8xf32>
    %58 = arith.subf %56, %57 : vector<1x8xf32>
    %cst_38 = arith.constant 0.000000e+00 : f32
    %59 = vector.broadcast %cst_38 : f32 to vector<1x8xf32>
    %60 = arith.maximumf %58, %59 : vector<1x8xf32>
    %c0_39 = arith.constant 0 : index
    %c0_40 = arith.constant 0 : index
    %61 = vector.load %arg3[%c0_39, %c0_40] : memref<1x8xf32, #tpu.memory_space<vmem>>, vector<1x8xf32>
    %cst_41 = arith.constant 9.99999974E-6 : f32
    %62 = vector.broadcast %cst_41 : f32 to vector<1x8xf32>
    %63 = arith.addf %60, %62 : vector<1x8xf32>
    %64 = math.rsqrt %63 : vector<1x8xf32>
    %65 = arith.mulf %61, %64 : vector<1x8xf32>
    %c0_42 = arith.constant 0 : index
    %c0_43 = arith.constant 0 : index
    %66 = vector.load %arg4[%c0_42, %c0_43] : memref<1x8xf32, #tpu.memory_space<vmem>>, vector<1x8xf32>
    %67 = arith.mulf %55, %65 : vector<1x8xf32>
    %68 = arith.subf %66, %67 : vector<1x8xf32>
    %69 = tpu.concatenate %65, %65, %65, %65, %65, %65, %65, %65, %65, %65, %65, %65, %65, %65, %65, %65 in 1 : vector<1x8xf32>, vector<1x8xf32>, vector<1x8xf32>, vector<1x8xf32>, vector<1x8xf32>, vector<1x8xf32>, vector<1x8xf32>, vector<1x8xf32>, vector<1x8xf32>, vector<1x8xf32>, vector<1x8xf32>, vector<1x8xf32>, vector<1x8xf32>, vector<1x8xf32>, vector<1x8xf32>, vector<1x8xf32> -> vector<1x128xf32>
    %70 = tpu.concatenate %68, %68, %68, %68, %68, %68, %68, %68, %68, %68, %68, %68, %68, %68, %68, %68 in 1 : vector<1x8xf32>, vector<1x8xf32>, vector<1x8xf32>, vector<1x8xf32>, vector<1x8xf32>, vector<1x8xf32>, vector<1x8xf32>, vector<1x8xf32>, vector<1x8xf32>, vector<1x8xf32>, vector<1x8xf32>, vector<1x8xf32>, vector<1x8xf32>, vector<1x8xf32>, vector<1x8xf32>, vector<1x8xf32> -> vector<1x128xf32>
    %71 = vector.broadcast %69 : vector<1x128xf32> to vector<32x128xf32>
    %72 = arith.mulf %45, %71 : vector<32x128xf32>
    %73 = vector.broadcast %70 : vector<1x128xf32> to vector<32x128xf32>
    %74 = arith.addf %72, %73 : vector<32x128xf32>
    %cst_44 = arith.constant 0.000000e+00 : f32
    %75 = vector.broadcast %cst_44 : f32 to vector<32x128xf32>
    %76 = arith.maximumf %74, %75 : vector<32x128xf32>
    %cst_45 = arith.constant 0.000000e+00 : f32
    %77 = vector.broadcast %cst_45 : f32 to vector<2x1x128xf32>
    %c0_46 = arith.constant 0 : index
    %c0_47 = arith.constant 0 : index
    %c0_48 = arith.constant 0 : index
    %78 = vector.load %arg9[%c0_46, %c0_47, %c0_48] : memref<2x18x128xf32, #tpu.memory_space<vmem>>, vector<2x1x128xf32>
    tpu.vector_store %arg9[%c0_46, %c0_47, %c0_48], %77 {strides = array<i32>} : memref<2x18x128xf32, #tpu.memory_space<vmem>>, vector<2x1x128xf32>,
    %cst_49 = arith.constant 0.000000e+00 : f32
    %79 = vector.broadcast %cst_49 : f32 to vector<2x1x128xf32>
    %c0_50 = arith.constant 0 : index
    %c17_51 = arith.constant 17 : index
    %c0_52 = arith.constant 0 : index
    %80 = vector.load %arg9[%c0_50, %c17_51, %c0_52] : memref<2x18x128xf32, #tpu.memory_space<vmem>>, vector<2x1x128xf32>
    tpu.vector_store %arg9[%c0_50, %c17_51, %c0_52], %79 {strides = array<i32>} : memref<2x18x128xf32, #tpu.memory_space<vmem>>, vector<2x1x128xf32>,
    %81 = vector.shape_cast %76 : vector<32x128xf32> to vector<2x16x128xf32>
    %c0_53 = arith.constant 0 : index
    %c1_54 = arith.constant 1 : index
    %c0_55 = arith.constant 0 : index
    %82 = vector.load %arg9[%c0_53, %c1_54, %c0_55] : memref<2x18x128xf32, #tpu.memory_space<vmem>>, vector<2x16x128xf32>
    tpu.vector_store %arg9[%c0_53, %c1_54, %c0_55], %81 {strides = array<i32>} : memref<2x18x128xf32, #tpu.memory_space<vmem>>, vector<2x16x128xf32>,
    %cst_56 = arith.constant 0.000000e+00 : f32
    %83 = vector.broadcast %cst_56 : f32 to vector<32x128xf32>
    %c0_57 = arith.constant 0 : index
    %c0_58 = arith.constant 0 : index
    %c0_59 = arith.constant 0 : index
    %84 = vector.load %arg9[%c0_57, %c0_58, %c0_59] : memref<2x18x128xf32, #tpu.memory_space<vmem>>, vector<2x16x128xf32>
    %85 = vector.shape_cast %84 : vector<2x16x128xf32> to vector<32x128xf32>
    %c0_60 = arith.constant 0 : index
    %c0_61 = arith.constant 0 : index
    %c0_62 = arith.constant 0 : index
    %86 = vector.load %arg2[%c0_60, %c0_61, %c0_62] : memref<3x128x128xf32, #tpu.memory_space<vmem>>, vector<1x128x128xf32>
    %87 = vector.shape_cast %86 : vector<1x128x128xf32> to vector<128x128xf32>
    %cst_63 = arith.constant dense<0.000000e+00> : vector<32x128xf32>
    %88 = tpu.matmul %85, %87, %cst_63 {dimension_numbers = #tpu.dot_dimension_numbers<[1], [0], [0], [1], [0, 0, 1, 1], [], []>} : vector<32x128xf32>, vector<128x128xf32>, vector<32x128xf32> -> vector<32x128xf32>
    %89 = arith.addf %83, %88 : vector<32x128xf32>
    %c0_64 = arith.constant 0 : index
    %c1_65 = arith.constant 1 : index
    %c0_66 = arith.constant 0 : index
    %90 = vector.load %arg9[%c0_64, %c1_65, %c0_66] : memref<2x18x128xf32, #tpu.memory_space<vmem>>, vector<2x16x128xf32>
    %91 = vector.shape_cast %90 : vector<2x16x128xf32> to vector<32x128xf32>
    %c1_67 = arith.constant 1 : index
    %c0_68 = arith.constant 0 : index
    %c0_69 = arith.constant 0 : index
    %92 = vector.load %arg2[%c1_67, %c0_68, %c0_69] : memref<3x128x128xf32, #tpu.memory_space<vmem>>, vector<1x128x128xf32>
    %93 = vector.shape_cast %92 : vector<1x128x128xf32> to vector<128x128xf32>
    %cst_70 = arith.constant dense<0.000000e+00> : vector<32x128xf32>
    %94 = tpu.matmul %91, %93, %cst_70 {dimension_numbers = #tpu.dot_dimension_numbers<[1], [0], [0], [1], [0, 0, 1, 1], [], []>} : vector<32x128xf32>, vector<128x128xf32>, vector<32x128xf32> -> vector<32x128xf32>
    %95 = arith.addf %89, %94 : vector<32x128xf32>
    %c0_71 = arith.constant 0 : index
    %c2_72 = arith.constant 2 : index
    %c0_73 = arith.constant 0 : index
    %96 = vector.load %arg9[%c0_71, %c2_72, %c0_73] : memref<2x18x128xf32, #tpu.memory_space<vmem>>, vector<2x16x128xf32>
    %97 = vector.shape_cast %96 : vector<2x16x128xf32> to vector<32x128xf32>
    %c2_74 = arith.constant 2 : index
    %c0_75 = arith.constant 0 : index
    %c0_76 = arith.constant 0 : index
    %98 = vector.load %arg2[%c2_74, %c0_75, %c0_76] : memref<3x128x128xf32, #tpu.memory_space<vmem>>, vector<1x128x128xf32>
    %99 = vector.shape_cast %98 : vector<1x128x128xf32> to vector<128x128xf32>
    %cst_77 = arith.constant dense<0.000000e+00> : vector<32x128xf32>
    %100 = tpu.matmul %97, %99, %cst_77 {dimension_numbers = #tpu.dot_dimension_numbers<[1], [0], [0], [1], [0, 0, 1, 1], [], []>} : vector<32x128xf32>, vector<128x128xf32>, vector<32x128xf32> -> vector<32x128xf32>
    %101 = arith.addf %95, %100 : vector<32x128xf32>
    %cst_78 = arith.constant dense<0.000000e+00> : vector<128xf32>
    %102 = vector.multi_reduction <add>, %101, %cst_78 [0] : vector<32x128xf32> to vector<128xf32>
    %103 = vector.shape_cast %102 : vector<128xf32> to vector<1x128xf32>
    %104 = arith.mulf %101, %101 : vector<32x128xf32>
    %cst_79 = arith.constant dense<0.000000e+00> : vector<128xf32>
    %105 = vector.multi_reduction <add>, %104, %cst_79 [0] : vector<32x128xf32> to vector<128xf32>
    %106 = vector.shape_cast %105 : vector<128xf32> to vector<1x128xf32>
    %107 = tpu.concatenate %103, %106 in 0 : vector<1x128xf32>, vector<1x128xf32> -> vector<2x128xf32>
    %cst_80 = arith.constant dense<0.000000e+00> : vector<2x8xf32>
    %108 = tpu.matmul %107, %20, %cst_80 {dimension_numbers = #tpu.dot_dimension_numbers<[1], [0], [0], [1], [0, 0, 1, 1], [], []>} : vector<2x128xf32>, vector<128x8xf32>, vector<2x8xf32> -> vector<2x8xf32>
    %cst_81 = arith.constant 0.001953125 : f32
    %109 = vector.broadcast %cst_81 : f32 to vector<2x8xf32>
    %110 = arith.mulf %108, %109 : vector<2x8xf32>
    %111 = vector.extract_strided_slice %110 {offsets = [0, 0], sizes = [1, 8], strides = [1, 1]} : vector<2x8xf32> to vector<1x8xf32>
    %112 = vector.extract_strided_slice %110 {offsets = [1, 0], sizes = [1, 8], strides = [1, 1]} : vector<2x8xf32> to vector<1x8xf32>
    %113 = arith.mulf %111, %111 : vector<1x8xf32>
    %114 = arith.subf %112, %113 : vector<1x8xf32>
    %cst_82 = arith.constant 0.000000e+00 : f32
    %115 = vector.broadcast %cst_82 : f32 to vector<1x8xf32>
    %116 = arith.maximumf %114, %115 : vector<1x8xf32>
    %c0_83 = arith.constant 0 : index
    %c0_84 = arith.constant 0 : index
    %117 = vector.load %arg5[%c0_83, %c0_84] : memref<1x8xf32, #tpu.memory_space<vmem>>, vector<1x8xf32>
    %cst_85 = arith.constant 9.99999974E-6 : f32
    %118 = vector.broadcast %cst_85 : f32 to vector<1x8xf32>
    %119 = arith.addf %116, %118 : vector<1x8xf32>
    %120 = math.rsqrt %119 : vector<1x8xf32>
    %121 = arith.mulf %117, %120 : vector<1x8xf32>
    %c0_86 = arith.constant 0 : index
    %c0_87 = arith.constant 0 : index
    %122 = vector.load %arg6[%c0_86, %c0_87] : memref<1x8xf32, #tpu.memory_space<vmem>>, vector<1x8xf32>
    %123 = arith.mulf %111, %121 : vector<1x8xf32>
    %124 = arith.subf %122, %123 : vector<1x8xf32>
    %125 = tpu.concatenate %121, %121, %121, %121, %121, %121, %121, %121, %121, %121, %121, %121, %121, %121, %121, %121 in 1 : vector<1x8xf32>, vector<1x8xf32>, vector<1x8xf32>, vector<1x8xf32>, vector<1x8xf32>, vector<1x8xf32>, vector<1x8xf32>, vector<1x8xf32>, vector<1x8xf32>, vector<1x8xf32>, vector<1x8xf32>, vector<1x8xf32>, vector<1x8xf32>, vector<1x8xf32>, vector<1x8xf32>, vector<1x8xf32> -> vector<1x128xf32>
    %126 = tpu.concatenate %124, %124, %124, %124, %124, %124, %124, %124, %124, %124, %124, %124, %124, %124, %124, %124 in 1 : vector<1x8xf32>, vector<1x8xf32>, vector<1x8xf32>, vector<1x8xf32>, vector<1x8xf32>, vector<1x8xf32>, vector<1x8xf32>, vector<1x8xf32>, vector<1x8xf32>, vector<1x8xf32>, vector<1x8xf32>, vector<1x8xf32>, vector<1x8xf32>, vector<1x8xf32>, vector<1x8xf32>, vector<1x8xf32> -> vector<1x128xf32>
    %127 = vector.broadcast %125 : vector<1x128xf32> to vector<32x128xf32>
    %128 = arith.mulf %101, %127 : vector<32x128xf32>
    %129 = vector.broadcast %126 : vector<1x128xf32> to vector<32x128xf32>
    %130 = arith.addf %128, %129 : vector<32x128xf32>
    %cst_88 = arith.constant 0.000000e+00 : f32
    %131 = vector.broadcast %cst_88 : f32 to vector<32x128xf32>
    %132 = arith.maximumf %130, %131 : vector<32x128xf32>
    %c0_89 = arith.constant 0 : index
    %c0_90 = arith.constant 0 : index
    %133 = vector.load %arg7[%c0_89, %c0_90] : memref<32x128xf32, #tpu.memory_space<vmem>>, vector<32x128xf32>
    tpu.vector_store %arg7[%c0_89, %c0_90], %132 {strides = array<i32>} : memref<32x128xf32, #tpu.memory_space<vmem>>, vector<32x128xf32>,
    return
  }
}

</mosaic_0001>

<llo_original>
// kernel: tpu_custom_call.1
$region0: #{tpu_custom_call.1}
  #allocation0 [shape = 'u32[]', space=smem, size = 0x4, offset = 0x4, fixed_abs, tag = 'smem constant byte address 0x4 - core index']
  #allocation1 [shape = 'u32[144,128]{1,0:T(1,128)}', space=vmem, size = 0x12000, scoped, tag = 'internal scratch']
  #allocation2 [shape = 'f32[2,18,64]{2,1,0:T(8,128)}', space=vmem, size = 0x6000, scoped, tag = 'scratch operand']
  #allocation3 [shape = 'f32[2,18,128]{2,1,0:T(8,128)}', space=vmem, size = 0x6000, scoped, tag = 'scratch operand']
  %s0 = inlined_call_operand.hbm [shape: f32[2,16,64], index: 0, kind: input, shape index: {}]
  %s1 = inlined_call_operand.hbm [shape: f32[3,64,128], index: 1, kind: input, shape index: {}]
  %s2 = inlined_call_operand.hbm [shape: f32[3,128,128], index: 2, kind: input, shape index: {}]
  %s3 = inlined_call_operand.vmem [shape: f32[1,8], index: 3, kind: input, shape index: {}]
  %s4 = inlined_call_operand.vmem [shape: f32[1,8], index: 4, kind: input, shape index: {}]
  %s5 = inlined_call_operand.vmem [shape: f32[1,8], index: 5, kind: input, shape index: {}]
  %s6 = inlined_call_operand.vmem [shape: f32[1,8], index: 6, kind: input, shape index: {}]
  %s7 = inlined_call_operand.hbm [shape: f32[32,128], index: 7, kind: output, shape index: {}]
  %s8 = sld [smem:[#allocation0]]
  $region50: #{tpu_custom_call.1} parent=0
    _
  %s10 = ssub.s32 1, %s8
  %s11 = scalar_select 0, %s10, %s8
  $region1: #{tpu_custom_call.1} parent=0
    #allocation4 [shape = 'u8[16384]{0}', space=vmem, size = 0x4000, scoped, tag = 'input window, operand 0, single buffered']
    #allocation5 [shape = 's32[1]{0}', space=sflag, size = 0x4, scoped, tag = 'scoped memory for tpu_custom_call.1']
    #allocation6 [shape = 's32[1]{0}', space=sflag, size = 0x4, scoped, tag = 'scoped memory for tpu_custom_call.1']
    #allocation7 [shape = 'u8[98304]{0}', space=vmem, size = 0x18000, scoped, tag = 'input window, operand 1, single buffered']
    #allocation8 [shape = 's32[1]{0}', space=sflag, size = 0x4, scoped, tag = 'scoped memory for tpu_custom_call.1']
    #allocation9 [shape = 'u8[196608]{0}', space=vmem, size = 0x30000, scoped, tag = 'input window, operand 2, single buffered']
    #allocation10 [shape = 'u8[16384]{0}', space=vmem, size = 0x4000, scoped, tag = 'output window, operand 0, single buffered']
    %12 = vsyncpa [#allocation5], 0
    %13 = vsyncpa [#allocation8], 0
    %14 = vsyncpa [#allocation6], 0
    // Predicated region
    $region2: #{tpu_custom_call.1} parent=1 // pred_check
      _
    $region3: #{tpu_custom_call.1} parent=1 // pred_check_branch
      %16 = sbr.rel (0) target = $region5
    $region4: #{tpu_custom_call.1} parent=1 // pred_region
      %s18 = ssub.s32 512, 512
      %19 = vsyncadd [#allocation5], %s18
      %s20 = sshll.u32 [#allocation4], 4
      %s21 = int_to_ptr.vmem [resolvable:$true] %s20
      %26 = dma.hbm_to_vmem [thread:$0]  %s0, 512, %s21, [#allocation5], 128, 128, 8
    $region5: #{tpu_custom_call.1} parent=1 // pred_fallthru
      _
    // Predicated region
    $region6: #{tpu_custom_call.1} parent=1 // pred_check
      _
    $region7: #{tpu_custom_call.1} parent=1 // pred_check_branch
      %28 = sbr.rel (0) target = $region9
    $region8: #{tpu_custom_call.1} parent=1 // pred_region
      %s30 = ssub.s32 3072, 3072
      %31 = vsyncadd [#allocation8], %s30
      %s32 = sshll.u32 [#allocation7], 4
      %s33 = int_to_ptr.vmem [resolvable:$true] %s32
      %38 = dma.hbm_to_vmem [thread:$0]  %s1, 3072, %s33, [#allocation8], 128, 128, 8
    $region9: #{tpu_custom_call.1} parent=1 // pred_fallthru
      _
    // Predicated region
    $region10: #{tpu_custom_call.1} parent=1 // pred_check
      _
    $region11: #{tpu_custom_call.1} parent=1 // pred_check_branch
      %40 = sbr.rel (0) target = $region13
    $region12: #{tpu_custom_call.1} parent=1 // pred_region
      %s42 = ssub.s32 6144, 6144
      %43 = vsyncadd [#allocation8], %s42
      %s44 = sshll.u32 [#allocation9], 4
      %s45 = int_to_ptr.vmem [resolvable:$true] %s44
      %50 = dma.hbm_to_vmem [thread:$0]  %s2, 6144, %s45, [#allocation8], 128, 128, 8
    $region13: #{tpu_custom_call.1} parent=1 // pred_fallthru
      _
    // Predicated region
    $region14: #{tpu_custom_call.1} parent=1 // pred_check
      _
    $region15: #{tpu_custom_call.1} parent=1 // pred_check_branch
      %52 = sbr.rel (0) target = $region17
    $region16: #{tpu_custom_call.1} parent=1 // pred_region
      _
    $region17: #{tpu_custom_call.1} parent=1 // pred_fallthru
      _
    // Predicated region
    $region18: #{tpu_custom_call.1} parent=1 // pred_check
      _
    $region19: #{tpu_custom_call.1} parent=1 // pred_check_branch
      %54 = sbr.rel (0) target = $region21
    $region20: #{tpu_custom_call.1} parent=1 // pred_region
      _
    $region21: #{tpu_custom_call.1} parent=1 // pred_fallthru
      _
    // Predicated region
    $region22: #{tpu_custom_call.1} parent=1 // pred_check
      _
    $region23: #{tpu_custom_call.1} parent=1 // pred_check_branch
      %56 = sbr.rel (0) target = $region25
    $region24: #{tpu_custom_call.1} parent=1 // pred_region
      _
    $region25: #{tpu_custom_call.1} parent=1 // pred_fallthru
      _
    // Predicated region
    $region26: #{tpu_custom_call.1} parent=1 // pred_check
      _
    $region27: #{tpu_custom_call.1} parent=1 // pred_check_branch
      %58 = sbr.rel (0) target = $region29
    $region28: #{tpu_custom_call.1} parent=1 // pred_region
      _
    $region29: #{tpu_custom_call.1} parent=1 // pred_fallthru
      _
    // Predicated region
    $region30: #{tpu_custom_call.1} parent=1 // pred_check
      _
    $region31: #{tpu_custom_call.1} parent=1 // pred_check_branch
      %60 = sbr.rel (0) target = $region33
    $region32: #{tpu_custom_call.1} parent=1 // pred_region
      %61 = dma.done [#allocation5], 512
    $region33: #{tpu_custom_call.1} parent=1 // pred_fallthru
      _
    // Predicated region
    $region34: #{tpu_custom_call.1} parent=1 // pred_check
      _
    $region35: #{tpu_custom_call.1} parent=1 // pred_check_branch
      %63 = sbr.rel (0) target = $region37
    $region36: #{tpu_custom_call.1} parent=1 // pred_region
      %64 = dma.done [#allocation8], 3072
    $region37: #{tpu_custom_call.1} parent=1 // pred_fallthru
      _
    // Predicated region
    $region38: #{tpu_custom_call.1} parent=1 // pred_check
      _
    $region39: #{tpu_custom_call.1} parent=1 // pred_check_branch
      %66 = sbr.rel (0) target = $region41
    $region40: #{tpu_custom_call.1} parent=1 // pred_region
      %67 = dma.done [#allocation8], 6144
    $region41: #{tpu_custom_call.1} parent=1 // pred_fallthru
      _
    %v68 = vlaneseq
    %v69 = vshrl.u32 %v68, 7
    %v70 = vadd.s32 %v69, 8
    %v71 = vadd.s32 %v69, 16
    %v72 = vadd.s32 %v69, 24
    %v73 = vadd.s32 %v69, 32
    %v74 = vadd.s32 %v69, 40
    %v75 = vadd.s32 %v69, 48
    %v76 = vadd.s32 %v69, 56
    %v77 = vadd.s32 %v69, 64
    %v78 = vadd.s32 %v69, 72
    %v79 = vadd.s32 %v69, 80
    %v80 = vadd.s32 %v69, 88
    %v81 = vadd.s32 %v69, 96
    %v82 = vadd.s32 %v69, 104
    %v83 = vadd.s32 %v69, 112
    %v84 = vadd.s32 %v69, 120
    %vm85 = vcmp.lt.s32.totalorder %v69, 0
    %v86 = vsub.s32 0, %v69
    %v87 = vsel %vm85, %v86, %v69
    %v88 = vshrl.u32 %v87, 3
    %v89 = vand.u32 %v87, 7
    %v90 = vsub.s32 0, %v89
    %v91 = vsel %vm85, %v90, %v89
    %vm92 = vcmp.lt.s32.totalorder %v70, 0
    %v93 = vsub.s32 0, %v70
    %v94 = vsel %vm92, %v93, %v70
    %v95 = vshrl.u32 %v94, 3
    %v96 = vand.u32 %v94, 7
    %v97 = vsub.s32 0, %v96
    %v98 = vsel %vm92, %v97, %v96
    %vm99 = vcmp.lt.s32.totalorder %v71, 0
    %v100 = vsub.s32 0, %v71
    %v101 = vsel %vm99, %v100, %v71
    %v102 = vshrl.u32 %v101, 3
    %v103 = vand.u32 %v101, 7
    %v104 = vsub.s32 0, %v103
    %v105 = vsel %vm99, %v104, %v103
    %vm106 = vcmp.lt.s32.totalorder %v72, 0
    %v107 = vsub.s32 0, %v72
    %v108 = vsel %vm106, %v107, %v72
    %v109 = vshrl.u32 %v108, 3
    %v110 = vand.u32 %v108, 7
    %v111 = vsub.s32 0, %v110
    %v112 = vsel %vm106, %v111, %v110
    %vm113 = vcmp.lt.s32.totalorder %v73, 0
    %v114 = vsub.s32 0, %v73
    %v115 = vsel %vm113, %v114, %v73
    %v116 = vshrl.u32 %v115, 3
    %v117 = vand.u32 %v115, 7
    %v118 = vsub.s32 0, %v117
    %v119 = vsel %vm113, %v118, %v117
    %vm120 = vcmp.lt.s32.totalorder %v74, 0
    %v121 = vsub.s32 0, %v74
    %v122 = vsel %vm120, %v121, %v74
    %v123 = vshrl.u32 %v122, 3
    %v124 = vand.u32 %v122, 7
    %v125 = vsub.s32 0, %v124
    %v126 = vsel %vm120, %v125, %v124
    %vm127 = vcmp.lt.s32.totalorder %v75, 0
    %v128 = vsub.s32 0, %v75
    %v129 = vsel %vm127, %v128, %v75
    %v130 = vshrl.u32 %v129, 3
    %v131 = vand.u32 %v129, 7
    %v132 = vsub.s32 0, %v131
    %v133 = vsel %vm127, %v132, %v131
    %vm134 = vcmp.lt.s32.totalorder %v76, 0
    %v135 = vsub.s32 0, %v76
    %v136 = vsel %vm134, %v135, %v76
    %v137 = vshrl.u32 %v136, 3
    %v138 = vand.u32 %v136, 7
    %v139 = vsub.s32 0, %v138
    %v140 = vsel %vm134, %v139, %v138
    %vm141 = vcmp.lt.s32.totalorder %v77, 0
    %v142 = vsub.s32 0, %v77
    %v143 = vsel %vm141, %v142, %v77
    %v144 = vshrl.u32 %v143, 3
    %v145 = vand.u32 %v143, 7
    %v146 = vsub.s32 0, %v145
    %v147 = vsel %vm141, %v146, %v145
    %vm148 = vcmp.lt.s32.totalorder %v78, 0
    %v149 = vsub.s32 0, %v78
    %v150 = vsel %vm148, %v149, %v78
    %v151 = vshrl.u32 %v150, 3
    %v152 = vand.u32 %v150, 7
    %v153 = vsub.s32 0, %v152
    %v154 = vsel %vm148, %v153, %v152
    %vm155 = vcmp.lt.s32.totalorder %v79, 0
    %v156 = vsub.s32 0, %v79
    %v157 = vsel %vm155, %v156, %v79
    %v158 = vshrl.u32 %v157, 3
    %v159 = vand.u32 %v157, 7
    %v160 = vsub.s32 0, %v159
    %v161 = vsel %vm155, %v160, %v159
    %vm162 = vcmp.lt.s32.totalorder %v80, 0
    %v163 = vsub.s32 0, %v80
    %v164 = vsel %vm162, %v163, %v80
    %v165 = vshrl.u32 %v164, 3
    %v166 = vand.u32 %v164, 7
    %v167 = vsub.s32 0, %v166
    %v168 = vsel %vm162, %v167, %v166
    %vm169 = vcmp.lt.s32.totalorder %v81, 0
    %v170 = vsub.s32 0, %v81
    %v171 = vsel %vm169, %v170, %v81
    %v172 = vshrl.u32 %v171, 3
    %v173 = vand.u32 %v171, 7
    %v174 = vsub.s32 0, %v173
    %v175 = vsel %vm169, %v174, %v173
    %vm176 = vcmp.lt.s32.totalorder %v82, 0
    %v177 = vsub.s32 0, %v82
    %v178 = vsel %vm176, %v177, %v82
    %v179 = vshrl.u32 %v178, 3
    %v180 = vand.u32 %v178, 7
    %v181 = vsub.s32 0, %v180
    %v182 = vsel %vm176, %v181, %v180
    %vm183 = vcmp.lt.s32.totalorder %v83, 0
    %v184 = vsub.s32 0, %v83
    %v185 = vsel %vm183, %v184, %v83
    %v186 = vshrl.u32 %v185, 3
    %v187 = vand.u32 %v185, 7
    %v188 = vsub.s32 0, %v187
    %v189 = vsel %vm183, %v188, %v187
    %vm190 = vcmp.lt.s32.totalorder %v84, 0
    %v191 = vsub.s32 0, %v84
    %v192 = vsel %vm190, %v191, %v84
    %v193 = vshrl.u32 %v192, 3
    %v194 = vand.u32 %v192, 7
    %v195 = vsub.s32 0, %v194
    %v196 = vsel %vm190, %v195, %v194
    %vm197 = vcmp.ne.s32.totalorder %v91, 0
    %vm198 = vcmp.ne.s32.totalorder %v98, 0
    %vm199 = vcmp.ne.s32.totalorder %v105, 0
    %vm200 = vcmp.ne.s32.totalorder %v112, 0
    %vm201 = vcmp.ne.s32.totalorder %v119, 0
    %vm202 = vcmp.ne.s32.totalorder %v126, 0
    %vm203 = vcmp.ne.s32.totalorder %v133, 0
    %vm204 = vcmp.ne.s32.totalorder %v140, 0
    %vm205 = vcmp.ne.s32.totalorder %v147, 0
    %vm206 = vcmp.ne.s32.totalorder %v154, 0
    %vm207 = vcmp.ne.s32.totalorder %v161, 0
    %vm208 = vcmp.ne.s32.totalorder %v168, 0
    %vm209 = vcmp.ne.s32.totalorder %v175, 0
    %vm210 = vcmp.ne.s32.totalorder %v182, 0
    %vm211 = vcmp.ne.s32.totalorder %v189, 0
    %vm212 = vcmp.ne.s32.totalorder %v196, 0
    %vm213 = vcmp.lt.s32.totalorder %v91, 0
    %vm214 = vcmp.lt.s32.totalorder %v98, 0
    %vm215 = vcmp.lt.s32.totalorder %v105, 0
    %vm216 = vcmp.lt.s32.totalorder %v112, 0
    %vm217 = vcmp.lt.s32.totalorder %v119, 0
    %vm218 = vcmp.lt.s32.totalorder %v126, 0
    %vm219 = vcmp.lt.s32.totalorder %v133, 0
    %vm220 = vcmp.lt.s32.totalorder %v140, 0
    %vm221 = vcmp.lt.s32.totalorder %v147, 0
    %vm222 = vcmp.lt.s32.totalorder %v154, 0
    %vm223 = vcmp.lt.s32.totalorder %v161, 0
    %vm224 = vcmp.lt.s32.totalorder %v168, 0
    %vm225 = vcmp.lt.s32.totalorder %v175, 0
    %vm226 = vcmp.lt.s32.totalorder %v182, 0
    %vm227 = vcmp.lt.s32.totalorder %v189, 0
    %vm228 = vcmp.lt.s32.totalorder %v196, 0
    %vm229 = vmand %vm213, %vm197
    %vm230 = vmand %vm214, %vm198
    %vm231 = vmand %vm215, %vm199
    %vm232 = vmand %vm216, %vm200
    %vm233 = vmand %vm217, %vm201
    %vm234 = vmand %vm218, %vm202
    %vm235 = vmand %vm219, %vm203
    %vm236 = vmand %vm220, %vm204
    %vm237 = vmand %vm221, %vm205
    %vm238 = vmand %vm222, %vm206
    %vm239 = vmand %vm223, %vm207
    %vm240 = vmand %vm224, %vm208
    %vm241 = vmand %vm225, %vm209
    %vm242 = vmand %vm226, %vm210
    %vm243 = vmand %vm227, %vm211
    %vm244 = vmand %vm228, %vm212
    %v245 = vadd.s32 %v91, 8
    %v246 = vadd.s32 %v98, 8
    %v247 = vadd.s32 %v105, 8
    %v248 = vadd.s32 %v112, 8
    %v249 = vadd.s32 %v119, 8
    %v250 = vadd.s32 %v126, 8
    %v251 = vadd.s32 %v133, 8
    %v252 = vadd.s32 %v140, 8
    %v253 = vadd.s32 %v147, 8
    %v254 = vadd.s32 %v154, 8
    %v255 = vadd.s32 %v161, 8
    %v256 = vadd.s32 %v168, 8
    %v257 = vadd.s32 %v175, 8
    %v258 = vadd.s32 %v182, 8
    %v259 = vadd.s32 %v189, 8
    %v260 = vadd.s32 %v196, 8
    %v261 = vsel %vm229, %v245, %v91
    %v262 = vsel %vm230, %v246, %v98
    %v263 = vsel %vm231, %v247, %v105
    %v264 = vsel %vm232, %v248, %v112
    %v265 = vsel %vm233, %v249, %v119
    %v266 = vsel %vm234, %v250, %v126
    %v267 = vsel %vm235, %v251, %v133
    %v268 = vsel %vm236, %v252, %v140
    %v269 = vsel %vm237, %v253, %v147
    %v270 = vsel %vm238, %v254, %v154
    %v271 = vsel %vm239, %v255, %v161
    %v272 = vsel %vm240, %v256, %v168
    %v273 = vsel %vm241, %v257, %v175
    %v274 = vsel %vm242, %v258, %v182
    %v275 = vsel %vm243, %v259, %v189
    %v276 = vsel %vm244, %v260, %v196
    %v277 = vlaneseq
    %v278 = vand.u32 %v277, 127
    %vm279 = vcmp.eq.s32.totalorder %v261, %v278
    %vm280 = vcmp.eq.s32.totalorder %v262, %v278
    %vm281 = vcmp.eq.s32.totalorder %v263, %v278
    %vm282 = vcmp.eq.s32.totalorder %v264, %v278
    %vm283 = vcmp.eq.s32.totalorder %v265, %v278
    %vm284 = vcmp.eq.s32.totalorder %v266, %v278
    %vm285 = vcmp.eq.s32.totalorder %v267, %v278
    %vm286 = vcmp.eq.s32.totalorder %v268, %v278
    %vm287 = vcmp.eq.s32.totalorder %v269, %v278
    %vm288 = vcmp.eq.s32.totalorder %v270, %v278
    %vm289 = vcmp.eq.s32.totalorder %v271, %v278
    %vm290 = vcmp.eq.s32.totalorder %v272, %v278
    %vm291 = vcmp.eq.s32.totalorder %v273, %v278
    %vm292 = vcmp.eq.s32.totalorder %v274, %v278
    %vm293 = vcmp.eq.s32.totalorder %v275, %v278
    %vm294 = vcmp.eq.s32.totalorder %v276, %v278
    %v295 = vsel %vm279, 1, 0
    %v296 = vsel %vm280, 1, 0
    %v297 = vsel %vm281, 1, 0
    %v298 = vsel %vm282, 1, 0
    %v299 = vsel %vm283, 1, 0
    %v300 = vsel %vm284, 1, 0
    %v301 = vsel %vm285, 1, 0
    %v302 = vsel %vm286, 1, 0
    %v303 = vsel %vm287, 1, 0
    %v304 = vsel %vm288, 1, 0
    %v305 = vsel %vm289, 1, 0
    %v306 = vsel %vm290, 1, 0
    %v307 = vsel %vm291, 1, 0
    %v308 = vsel %vm292, 1, 0
    %v309 = vsel %vm293, 1, 0
    %v310 = vsel %vm294, 1, 0
    %v311 = vcvt.s32.f32 %v295
    %v312 = vcvt.s32.f32 %v296
    %v313 = vcvt.s32.f32 %v297
    %v314 = vcvt.s32.f32 %v298
    %v315 = vcvt.s32.f32 %v299
    %v316 = vcvt.s32.f32 %v300
    %v317 = vcvt.s32.f32 %v301
    %v318 = vcvt.s32.f32 %v302
    %v319 = vcvt.s32.f32 %v303
    %v320 = vcvt.s32.f32 %v304
    %v321 = vcvt.s32.f32 %v305
    %v322 = vcvt.s32.f32 %v306
    %v323 = vcvt.s32.f32 %v307
    %v324 = vcvt.s32.f32 %v308
    %v325 = vcvt.s32.f32 %v309
    %v326 = vcvt.s32.f32 %v310
    %vm327 = vcmask 516096
    %328 = vst.msk [vmem:[#allocation2] sm:$0x1] %vm327, 0.0
    %329 = vst.msk [vmem:[#allocation2 + $0x18] sm:$0x1] %vm327, 0.0
    %330 = vst.msk [vmem:[#allocation2 + $0x11] sm:$0x1] %vm327, 0.0
    %331 = vst.msk [vmem:[#allocation2 + $0x29] sm:$0x1] %vm327, 0.0
    %v332 = vld [vmem:[#allocation4] sm:$0xff]
    %v333 = vld [vmem:[#allocation4 + $0x8] sm:$0xff]
    %v334 = vld [vmem:[#allocation4 + $0x10] sm:$0xff]
    %v335 = vld [vmem:[#allocation4 + $0x18] sm:$0xff]
    %vm336 = vcmask 523264
    %337 = vst.msk [vmem:[#allocation2 + $0x1] sm:$0xff] %vm336, %v332
    %338 = vst.msk [vmem:[#allocation2 + $0x9] sm:$0xff] %vm336, %v333
    %339 = vst.msk [vmem:[#allocation2 + $0x19] sm:$0xff] %vm336, %v334
    %340 = vst.msk [vmem:[#allocation2 + $0x21] sm:$0xff] %vm336, %v335
    %v341 = vld [vmem:[#allocation2] sm:$0xff]
    %v342 = vld [vmem:[#allocation2 + $0x8] sm:$0xff]
    %v343 = vld [vmem:[#allocation2 + $0x18] sm:$0xff]
    %v344 = vld [vmem:[#allocation2 + $0x20] sm:$0xff]
    %v345 = vld [vmem:[#allocation7] sm:$0xff]
    %v346 = vld [vmem:[#allocation7 + $0x8] sm:$0xff]
    %v347 = vld [vmem:[#allocation7 + $0x10] sm:$0xff]
    %v348 = vld [vmem:[#allocation7 + $0x18] sm:$0xff]
    %v349 = vld [vmem:[#allocation7 + $0x20] sm:$0xff]
    %v350 = vld [vmem:[#allocation7 + $0x28] sm:$0xff]
    %v351 = vld [vmem:[#allocation7 + $0x30] sm:$0xff]
    %v352 = vld [vmem:[#allocation7 + $0x38] sm:$0xff]
    %v353 = vld [vmem:[#allocation2 + $0x1] sm:$0xff]
    %v354 = vld [vmem:[#allocation2 + $0x9] sm:$0xff]
    %v355 = vld [vmem:[#allocation2 + $0x19] sm:$0xff]
    %v356 = vld [vmem:[#allocation2 + $0x21] sm:$0xff]
    %s357 = scalar_lea.vmem [#allocation7], 64
    %v358 = vld [vmem:[%s357] sm:$0xff]
    %v359 = vld [vmem:[%s357 + $0x8] sm:$0xff]
    %v360 = vld [vmem:[%s357 + $0x10] sm:$0xff]
    %v361 = vld [vmem:[%s357 + $0x18] sm:$0xff]
    %v362 = vld [vmem:[%s357 + $0x20] sm:$0xff]
    %v363 = vld [vmem:[%s357 + $0x28] sm:$0xff]
    %v364 = vld [vmem:[%s357 + $0x30] sm:$0xff]
    %v365 = vld [vmem:[%s357 + $0x38] sm:$0xff]
    %v367 = vsel %vm336, %v353, 0
    %v370 = vsel %vm336, %v354, 0
    %v373 = vsel %vm336, %v355, 0
    %v376 = vsel %vm336, %v356, 0
    %378 = vmatprep.subr.mxu0 0.0
    %379 = vmatpush1.msra.mxu0 %v358
    %380 = vmatprep.subr.mxu0 0.0
    %381 = vmatpush1.msra.mxu0 %v359
    %382 = vmatprep.subr.mxu0 0.0
    %383 = vmatpush1.msra.mxu0 %v360
    %384 = vmatprep.subr.mxu0 0.0
    %385 = vmatpush1.msra.mxu0 %v361
    %386 = vmatprep.subr.mxu0 0.0
    %387 = vmatpush1.msra.mxu0 %v362
    %388 = vmatprep.subr.mxu0 0.0
    %389 = vmatpush1.msra.mxu0 %v363
    %390 = vmatprep.subr.mxu0 0.0
    %391 = vmatpush1.msra.mxu0 %v364
    %392 = vmatprep.subr.mxu0 0.0
    %393 = vmatpush1.msra.mxu0 %v365
    %394 = vmatprep.subr.mxu0 0.0
    %395 = vmatpush1.msra.mxu0 0.0
    %396 = vmatprep.subr.mxu0 0.0
    %397 = vmatpush1.msra.mxu0 0.0
    %398 = vmatprep.subr.mxu0 0.0
    %399 = vmatpush1.msra.mxu0 0.0
    %400 = vmatprep.subr.mxu0 0.0
    %401 = vmatpush1.msra.mxu0 0.0
    %402 = vmatprep.subr.mxu0 0.0
    %403 = vmatpush1.msra.mxu0 0.0
    %404 = vmatprep.subr.mxu0 0.0
    %405 = vmatpush1.msra.mxu0 0.0
    %406 = vmatprep.subr.mxu0 0.0
    %407 = vmatpush1.msra.mxu0 0.0
    %408 = vmatprep.subr.mxu0 0.0
    %409 = vmatpush1.msra.mxu0 0.0
    %410 = vmatprep.subr.mxu0 0.0
    %411 = vmatpush1.msra.mxu0 0.0
    %412 = vmatprep.subr.mxu0 0.0
    %413 = vmatpush1.msra.mxu0 0.0
    %414 = vmatprep.subr.mxu0 0.0
    %415 = vmatpush1.msra.mxu0 0.0
    %416 = vmatprep.subr.mxu0 0.0
    %417 = vmatpush1.msra.mxu0 0.0
    %418 = vmatprep.subr.mxu0 0.0
    %419 = vmatpush1.msra.mxu0 0.0
    %420 = vmatprep.subr.mxu0 0.0
    %421 = vmatpush1.msra.mxu0 0.0
    %422 = vmatprep.subr.mxu0 0.0
    %423 = vmatpush1.msra.mxu0 0.0
    %424 = vmatprep.subr.mxu0 0.0
    %425 = vmatpush1.msra.mxu0 0.0
    %426 = vmatprep.subr.mxu0 0.0
    %427 = vmatpush1.msra.mxu0 0.0
    %428 = vmatprep.subr.mxu0 0.0
    %429 = vmatpush1.msra.mxu0 0.0
    %430 = vmatprep.subr.mxu0 0.0
    %431 = vmatpush1.msra.mxu0 0.0
    %432 = vmatprep.subr.mxu0 0.0
    %433 = vmatpush1.msra.mxu0 0.0
    %434 = vmatprep.subr.mxu0 0.0
    %435 = vmatpush1.msra.mxu0 0.0
    %436 = vmatprep.subr.mxu0 0.0
    %437 = vmatpush1.msra.mxu0 0.0
    %438 = vmatprep.subr.mxu0 0.0
    %439 = vmatpush1.msra.mxu0 0.0
    %440 = vmatprep.subr.mxu0 0.0
    %441 = vmatpush1.msra.mxu0 0.0
    %442 = vmatprep.mubr.f32.mxu0 0.0
    %443 = vmatmul.mubr.f32.gmra.mrb[0].mxu0 %v367
    %v444 = vpop.f32.mrb[0].mxu0
    %v445 = vadd.f32 0.0, %v444
    %v446 = vpop.f32.mrb[0].mxu0
    %447 = vmatprep.mubr.f32.mxu0 0.0
    %448 = vmatmul.mubr.f32.gmra.mrb[0].mxu0 %v370
    %v449 = vpop.f32.mrb[0].mxu0
    %v450 = vadd.f32 0.0, %v449
    %v451 = vpop.f32.mrb[0].mxu0
    %452 = vmatprep.mubr.f32.mxu0 0.0
    %453 = vmatmul.mubr.f32.gmra.mrb[0].mxu0 %v373
    %v454 = vpop.f32.mrb[0].mxu0
    %v455 = vadd.f32 0.0, %v454
    %v456 = vpop.f32.mrb[0].mxu0
    %457 = vmatprep.mubr.f32.mxu0 0.0
    %458 = vmatmul.mubr.f32.gmra.mrb[0].mxu0 %v376
    %v459 = vpop.f32.mrb[0].mxu0
    %v460 = vadd.f32 0.0, %v459
    %v461 = vpop.f32.mrb[0].mxu0
    %462 = vdwg.mxu0
    %v464 = vsel %vm336, %v341, 0
    %v467 = vsel %vm336, %v342, 0
    %v470 = vsel %vm336, %v343, 0
    %v473 = vsel %vm336, %v344, 0
    %475 = vmatprep.subr.mxu0 0.0
    %476 = vmatpush1.msra.mxu0 %v345
    %477 = vmatprep.subr.mxu0 0.0
    %478 = vmatpush1.msra.mxu0 %v346
    %479 = vmatprep.subr.mxu0 0.0
    %480 = vmatpush1.msra.mxu0 %v347
    %481 = vmatprep.subr.mxu0 0.0
    %482 = vmatpush1.msra.mxu0 %v348
    %483 = vmatprep.subr.mxu0 0.0
    %484 = vmatpush1.msra.mxu0 %v349
    %485 = vmatprep.subr.mxu0 0.0
    %486 = vmatpush1.msra.mxu0 %v350
    %487 = vmatprep.subr.mxu0 0.0
    %488 = vmatpush1.msra.mxu0 %v351
    %489 = vmatprep.subr.mxu0 0.0
    %490 = vmatpush1.msra.mxu0 %v352
    %491 = vmatprep.subr.mxu0 0.0
    %492 = vmatpush1.msra.mxu0 0.0
    %493 = vmatprep.subr.mxu0 0.0
    %494 = vmatpush1.msra.mxu0 0.0
    %495 = vmatprep.subr.mxu0 0.0
    %496 = vmatpush1.msra.mxu0 0.0
    %497 = vmatprep.subr.mxu0 0.0
    %498 = vmatpush1.msra.mxu0 0.0
    %499 = vmatprep.subr.mxu0 0.0
    %500 = vmatpush1.msra.mxu0 0.0
    %501 = vmatprep.subr.mxu0 0.0
    %502 = vmatpush1.msra.mxu0 0.0
    %503 = vmatprep.subr.mxu0 0.0
    %504 = vmatpush1.msra.mxu0 0.0
    %505 = vmatprep.subr.mxu0 0.0
    %506 = vmatpush1.msra.mxu0 0.0
    %507 = vmatprep.subr.mxu0 0.0
    %508 = vmatpush1.msra.mxu0 0.0
    %509 = vmatprep.subr.mxu0 0.0
    %510 = vmatpush1.msra.mxu0 0.0
    %511 = vmatprep.subr.mxu0 0.0
    %512 = vmatpush1.msra.mxu0 0.0
    %513 = vmatprep.subr.mxu0 0.0
    %514 = vmatpush1.msra.mxu0 0.0
    %515 = vmatprep.subr.mxu0 0.0
    %516 = vmatpush1.msra.mxu0 0.0
    %517 = vmatprep.subr.mxu0 0.0
    %518 = vmatpush1.msra.mxu0 0.0
    %519 = vmatprep.subr.mxu0 0.0
    %520 = vmatpush1.msra.mxu0 0.0
    %521 = vmatprep.subr.mxu0 0.0
    %522 = vmatpush1.msra.mxu0 0.0
    %523 = vmatprep.subr.mxu0 0.0
    %524 = vmatpush1.msra.mxu0 0.0
    %525 = vmatprep.subr.mxu0 0.0
    %526 = vmatpush1.msra.mxu0 0.0
    %527 = vmatprep.subr.mxu0 0.0
    %528 = vmatpush1.msra.mxu0 0.0
    %529 = vmatprep.subr.mxu0 0.0
    %530 = vmatpush1.msra.mxu0 0.0
    %531 = vmatprep.subr.mxu0 0.0
    %532 = vmatpush1.msra.mxu0 0.0
    %533 = vmatprep.subr.mxu0 0.0
    %534 = vmatpush1.msra.mxu0 0.0
    %535 = vmatprep.subr.mxu0 0.0
    %536 = vmatpush1.msra.mxu0 0.0
    %537 = vmatprep.subr.mxu0 0.0
    %538 = vmatpush1.msra.mxu0 0.0
    %539 = vmatprep.mubr.f32.mxu0 0.0
    %540 = vmatmul.mubr.f32.gmra.mrb[0].mxu0 %v464
    %v541 = vpop.f32.mrb[0].mxu0
    %v542 = vadd.f32 %v445, %v541
    %v543 = vpop.f32.mrb[0].mxu0
    %544 = vmatprep.mubr.f32.mxu0 0.0
    %545 = vmatmul.mubr.f32.gmra.mrb[0].mxu0 %v467
    %v546 = vpop.f32.mrb[0].mxu0
    %v547 = vadd.f32 %v450, %v546
    %v548 = vpop.f32.mrb[0].mxu0
    %549 = vmatprep.mubr.f32.mxu0 0.0
    %550 = vmatmul.mubr.f32.gmra.mrb[0].mxu0 %v470
    %v551 = vpop.f32.mrb[0].mxu0
    %v552 = vadd.f32 %v455, %v551
    %v553 = vpop.f32.mrb[0].mxu0
    %554 = vmatprep.mubr.f32.mxu0 0.0
    %555 = vmatmul.mubr.f32.gmra.mrb[0].mxu0 %v473
    %v556 = vpop.f32.mrb[0].mxu0
    %v557 = vadd.f32 %v460, %v556
    %v558 = vpop.f32.mrb[0].mxu0
    %559 = vdwg.mxu0
    %v560 = vld [vmem:[#allocation2 + $0x2] sm:$0xff]
    %v561 = vld [vmem:[#allocation2 + $0xa] sm:$0xff]
    %v562 = vld [vmem:[#allocation2 + $0x1a] sm:$0xff]
    %v563 = vld [vmem:[#allocation2 + $0x22] sm:$0xff]
    %s564 = scalar_lea.vmem [#allocation7], 128
    %v565 = vld [vmem:[%s564] sm:$0xff]
    %v566 = vld [vmem:[%s564 + $0x8] sm:$0xff]
    %v567 = vld [vmem:[%s564 + $0x10] sm:$0xff]
    %v568 = vld [vmem:[%s564 + $0x18] sm:$0xff]
    %v569 = vld [vmem:[%s564 + $0x20] sm:$0xff]
    %v570 = vld [vmem:[%s564 + $0x28] sm:$0xff]
    %v571 = vld [vmem:[%s564 + $0x30] sm:$0xff]
    %v572 = vld [vmem:[%s564 + $0x38] sm:$0xff]
    %v574 = vsel %vm336, %v560, 0
    %v577 = vsel %vm336, %v561, 0
    %v580 = vsel %vm336, %v562, 0
    %v583 = vsel %vm336, %v563, 0
    %585 = vmatprep.subr.mxu0 0.0
    %586 = vmatpush1.msra.mxu0 %v565
    %587 = vmatprep.subr.mxu0 0.0
    %588 = vmatpush1.msra.mxu0 %v566
    %589 = vmatprep.subr.mxu0 0.0
    %590 = vmatpush1.msra.mxu0 %v567
    %591 = vmatprep.subr.mxu0 0.0
    %592 = vmatpush1.msra.mxu0 %v568
    %593 = vmatprep.subr.mxu0 0.0
    %594 = vmatpush1.msra.mxu0 %v569
    %595 = vmatprep.subr.mxu0 0.0
    %596 = vmatpush1.msra.mxu0 %v570
    %597 = vmatprep.subr.mxu0 0.0
    %598 = vmatpush1.msra.mxu0 %v571
    %599 = vmatprep.subr.mxu0 0.0
    %600 = vmatpush1.msra.mxu0 %v572
    %601 = vmatprep.subr.mxu0 0.0
    %602 = vmatpush1.msra.mxu0 0.0
    %603 = vmatprep.subr.mxu0 0.0
    %604 = vmatpush1.msra.mxu0 0.0
    %605 = vmatprep.subr.mxu0 0.0
    %606 = vmatpush1.msra.mxu0 0.0
    %607 = vmatprep.subr.mxu0 0.0
    %608 = vmatpush1.msra.mxu0 0.0
    %609 = vmatprep.subr.mxu0 0.0
    %610 = vmatpush1.msra.mxu0 0.0
    %611 = vmatprep.subr.mxu0 0.0
    %612 = vmatpush1.msra.mxu0 0.0
    %613 = vmatprep.subr.mxu0 0.0
    %614 = vmatpush1.msra.mxu0 0.0
    %615 = vmatprep.subr.mxu0 0.0
    %616 = vmatpush1.msra.mxu0 0.0
    %617 = vmatprep.subr.mxu0 0.0
    %618 = vmatpush1.msra.mxu0 0.0
    %619 = vmatprep.subr.mxu0 0.0
    %620 = vmatpush1.msra.mxu0 0.0
    %621 = vmatprep.subr.mxu0 0.0
    %622 = vmatpush1.msra.mxu0 0.0
    %623 = vmatprep.subr.mxu0 0.0
    %624 = vmatpush1.msra.mxu0 0.0
    %625 = vmatprep.subr.mxu0 0.0
    %626 = vmatpush1.msra.mxu0 0.0
    %627 = vmatprep.subr.mxu0 0.0
    %628 = vmatpush1.msra.mxu0 0.0
    %629 = vmatprep.subr.mxu0 0.0
    %630 = vmatpush1.msra.mxu0 0.0
    %631 = vmatprep.subr.mxu0 0.0
    %632 = vmatpush1.msra.mxu0 0.0
    %633 = vmatprep.subr.mxu0 0.0
    %634 = vmatpush1.msra.mxu0 0.0
    %635 = vmatprep.subr.mxu0 0.0
    %636 = vmatpush1.msra.mxu0 0.0
    %637 = vmatprep.subr.mxu0 0.0
    %638 = vmatpush1.msra.mxu0 0.0
    %639 = vmatprep.subr.mxu0 0.0
    %640 = vmatpush1.msra.mxu0 0.0
    %641 = vmatprep.subr.mxu0 0.0
    %642 = vmatpush1.msra.mxu0 0.0
    %643 = vmatprep.subr.mxu0 0.0
    %644 = vmatpush1.msra.mxu0 0.0
    %645 = vmatprep.subr.mxu0 0.0
    %646 = vmatpush1.msra.mxu0 0.0
    %647 = vmatprep.subr.mxu0 0.0
    %648 = vmatpush1.msra.mxu0 0.0
    %649 = vmatprep.mubr.f32.mxu0 0.0
    %650 = vmatmul.mubr.f32.gmra.mrb[0].mxu0 %v574
    %v651 = vpop.f32.mrb[0].mxu0
    %v652 = vadd.f32 0.0, %v651
    %v653 = vpop.f32.mrb[0].mxu0
    %654 = vmatprep.mubr.f32.mxu0 0.0
    %655 = vmatmul.mubr.f32.gmra.mrb[0].mxu0 %v577
    %v656 = vpop.f32.mrb[0].mxu0
    %v657 = vadd.f32 0.0, %v656
    %v658 = vpop.f32.mrb[0].mxu0
    %659 = vmatprep.mubr.f32.mxu0 0.0
    %660 = vmatmul.mubr.f32.gmra.mrb[0].mxu0 %v580
    %v661 = vpop.f32.mrb[0].mxu0
    %v662 = vadd.f32 0.0, %v661
    %v663 = vpop.f32.mrb[0].mxu0
    %664 = vmatprep.mubr.f32.mxu0 0.0
    %665 = vmatmul.mubr.f32.gmra.mrb[0].mxu0 %v583
    %v666 = vpop.f32.mrb[0].mxu0
    %v667 = vadd.f32 0.0, %v666
    %v668 = vpop.f32.mrb[0].mxu0
    %669 = vdwg.mxu0
    %v670 = vadd.f32 %v542, %v652
    %v671 = vadd.f32 %v547, %v657
    %v672 = vadd.f32 %v552, %v662
    %v673 = vadd.f32 %v557, %v667
    %v674 = vadd.f32 %v670, %v671
    %v675 = vadd.f32 %v674, %v672
    %v676 = vadd.f32 %v675, %v673
    %v677 = vrot.slane %v676, 4
    %v678 = vadd.f32 %v676, %v677
    %v679 = vrot.slane %v678, 2
    %v680 = vadd.f32 %v678, %v679
    %v681 = vrot.slane %v680, 1
    %v682 = vadd.f32 %v680, %v681
    %v683 = vmul.f32 %v670, %v670
    %v684 = vmul.f32 %v671, %v671
    %v685 = vmul.f32 %v672, %v672
    %v686 = vmul.f32 %v673, %v673
    %v687 = vadd.f32 %v683, %v684
    %v688 = vadd.f32 %v687, %v685
    %v689 = vadd.f32 %v688, %v686
    %v690 = vrot.slane %v689, 4
    %v691 = vadd.f32 %v689, %v690
    %v692 = vrot.slane %v691, 2
    %v693 = vadd.f32 %v691, %v692
    %v694 = vrot.slane %v693, 1
    %v695 = vadd.f32 %v693, %v694
    %vm696 = vcmask 1040384
    %v697 = vsel %vm696, %v682, %v695
    %698 = vmatprep.subr.mxu0 0.0
    %699 = vmatpush1.msra.mxu0 %v311
    %700 = vmatprep.subr.mxu0 0.0
    %701 = vmatpush1.msra.mxu0 %v312
    %702 = vmatprep.subr.mxu0 0.0
    %703 = vmatpush1.msra.mxu0 %v313
    %704 = vmatprep.subr.mxu0 0.0
    %705 = vmatpush1.msra.mxu0 %v314
    %706 = vmatprep.subr.mxu0 0.0
    %707 = vmatpush1.msra.mxu0 %v315
    %708 = vmatprep.subr.mxu0 0.0
    %709 = vmatpush1.msra.mxu0 %v316
    %710 = vmatprep.subr.mxu0 0.0
    %711 = vmatpush1.msra.mxu0 %v317
    %712 = vmatprep.subr.mxu0 0.0
    %713 = vmatpush1.msra.mxu0 %v318
    %714 = vmatprep.subr.mxu0 0.0
    %715 = vmatpush1.msra.mxu0 %v319
    %716 = vmatprep.subr.mxu0 0.0
    %717 = vmatpush1.msra.mxu0 %v320
    %718 = vmatprep.subr.mxu0 0.0
    %719 = vmatpush1.msra.mxu0 %v321
    %720 = vmatprep.subr.mxu0 0.0
    %721 = vmatpush1.msra.mxu0 %v322
    %722 = vmatprep.subr.mxu0 0.0
    %723 = vmatpush1.msra.mxu0 %v323
    %724 = vmatprep.subr.mxu0 0.0
    %725 = vmatpush1.msra.mxu0 %v324
    %726 = vmatprep.subr.mxu0 0.0
    %727 = vmatpush1.msra.mxu0 %v325
    %728 = vmatprep.subr.mxu0 0.0
    %729 = vmatpush1.msra.mxu0 %v326
    %730 = vmatprep.subr.mxu0 0.0
    %731 = vmatpush1.msra.mxu0 0.0
    %732 = vmatprep.subr.mxu0 0.0
    %733 = vmatpush1.msra.mxu0 0.0
    %734 = vmatprep.subr.mxu0 0.0
    %735 = vmatpush1.msra.mxu0 0.0
    %736 = vmatprep.subr.mxu0 0.0
    %737 = vmatpush1.msra.mxu0 0.0
    %738 = vmatprep.subr.mxu0 0.0
    %739 = vmatpush1.msra.mxu0 0.0
    %740 = vmatprep.subr.mxu0 0.0
    %741 = vmatpush1.msra.mxu0 0.0
    %742 = vmatprep.subr.mxu0 0.0
    %743 = vmatpush1.msra.mxu0 0.0
    %744 = vmatprep.subr.mxu0 0.0
    %745 = vmatpush1.msra.mxu0 0.0
    %746 = vmatprep.subr.mxu0 0.0
    %747 = vmatpush1.msra.mxu0 0.0
    %748 = vmatprep.subr.mxu0 0.0
    %749 = vmatpush1.msra.mxu0 0.0
    %750 = vmatprep.subr.mxu0 0.0
    %751 = vmatpush1.msra.mxu0 0.0
    %752 = vmatprep.subr.mxu0 0.0
    %753 = vmatpush1.msra.mxu0 0.0
    %754 = vmatprep.subr.mxu0 0.0
    %755 = vmatpush1.msra.mxu0 0.0
    %756 = vmatprep.subr.mxu0 0.0
    %757 = vmatpush1.msra.mxu0 0.0
    %758 = vmatprep.subr.mxu0 0.0
    %759 = vmatpush1.msra.mxu0 0.0
    %760 = vmatprep.subr.mxu0 0.0
    %761 = vmatpush1.msra.mxu0 0.0
    %762 = vmatprep.mubr.f32.mxu0 0.0
    %763 = vmatmul.mubr.f32.gmra.mrb[0].mxu0 %v697
    %v764 = vpop.f32.mrb[0].mxu0
    %v765 = vadd.f32 0.0, %v764
    %v766 = vpop.f32.mrb[0].mxu0
    %767 = vdwg.mxu0
    %v768 = vmul.f32 %v765, 0.001953125
    %v769 = vmul.f32 %v768, %v768
    %v771 = vrot.slane %v769, 7
    %v773 = vsub.f32 %v768, %v771
    %v774 = vmax.f32 %v773, 0.0
    %v775 = vld [vmem:[%s3] sm:$0x1]
    %v776 = vadd.f32 %v774, 1e-05
    %v777 = vrsqrt.pop %v776
    %v780 = vunpack.c.l.s4 1966171168
    %v781 = vunpack.c.0.s8 %v780
    %v782 = vlaneseq
    %v783 = vshrl.u32 %v782, 7
    %v784 = vsub.s32 %v781, %v783
    %v785 = vrot.slane %v777, %v784
    %v786 = vcombine.high %v785, %v785
    %v788 = vunpack.c.l.s4 1966171168
    %v789 = vunpack.c.0.s8 %v788
    %v790 = vlaneseq
    %v791 = vshrl.u32 %v790, 7
    %v792 = vsub.s32 %v789, %v791
    %v793 = vrot.slane %v786, %v792
    %v795 = vmul.f32 %v775, %v793
    %v796 = vld [vmem:[%s4] sm:$0x1]
    %v797 = vmul.f32 %v768, %v795
    %v798 = vsub.f32 %v796, %v797
    %v800 = vlaneseq
    %v801 = vshrl.u32 %v800, 7
    %v802 = vsub.s32 0, %v801
    %v803 = vrot.slane %v795, %v802
    %804 = vrot.lane.b32.xlu0 %v803, 8
    %v805 = vpop.permute.xlu0 %804
    %807 = vrot.lane.b32.xlu0 %v803, 16
    %v808 = vpop.permute.xlu0 %807
    %810 = vrot.lane.b32.xlu0 %v803, 24
    %v811 = vpop.permute.xlu0 %810
    %813 = vrot.lane.b32.xlu0 %v803, 32
    %v814 = vpop.permute.xlu0 %813
    %816 = vrot.lane.b32.xlu0 %v803, 40
    %v817 = vpop.permute.xlu0 %816
    %819 = vrot.lane.b32.xlu0 %v803, 48
    %v820 = vpop.permute.xlu0 %819
    %822 = vrot.lane.b32.xlu0 %v803, 56
    %v823 = vpop.permute.xlu0 %822
    %825 = vrot.lane.b32.xlu0 %v803, 64
    %v826 = vpop.permute.xlu0 %825
    %828 = vrot.lane.b32.xlu0 %v803, 72
    %v829 = vpop.permute.xlu0 %828
    %831 = vrot.lane.b32.xlu0 %v803, 80
    %v832 = vpop.permute.xlu0 %831
    %834 = vrot.lane.b32.xlu0 %v803, 88
    %v835 = vpop.permute.xlu0 %834
    %837 = vrot.lane.b32.xlu0 %v803, 96
    %v838 = vpop.permute.xlu0 %837
    %840 = vrot.lane.b32.xlu0 %v803, 104
    %v841 = vpop.permute.xlu0 %840
    %843 = vrot.lane.b32.xlu0 %v803, 112
    %v844 = vpop.permute.xlu0 %843
    %846 = vrot.lane.b32.xlu0 %v803, 120
    %v847 = vpop.permute.xlu0 %846
    %vm849 = vcmask 64512
    %v850 = vsel %vm849, %v795, %v805
    %vm851 = vcmask 130048
    %v852 = vsel %vm851, %v850, %v808
    %vm853 = vcmask 195584
    %v854 = vsel %vm853, %v852, %v811
    %vm855 = vcmask 261120
    %v856 = vsel %vm855, %v854, %v814
    %vm857 = vcmask 326656
    %v858 = vsel %vm857, %v856, %v817
    %vm859 = vcmask 392192
    %v860 = vsel %vm859, %v858, %v820
    %vm861 = vcmask 457728
    %v862 = vsel %vm861, %v860, %v823
    %v863 = vsel %vm336, %v862, %v826
    %vm864 = vcmask 588800
    %v865 = vsel %vm864, %v863, %v829
    %vm866 = vcmask 654336
    %v867 = vsel %vm866, %v865, %v832
    %vm868 = vcmask 719872
    %v869 = vsel %vm868, %v867, %v835
    %vm870 = vcmask 785408
    %v871 = vsel %vm870, %v869, %v838
    %vm872 = vcmask 850944
    %v873 = vsel %vm872, %v871, %v841
    %vm874 = vcmask 916480
    %v875 = vsel %vm874, %v873, %v844
    %vm876 = vcmask 982016
    %v877 = vsel %vm876, %v875, %v847
    %v879 = vlaneseq
    %v880 = vshrl.u32 %v879, 7
    %v881 = vsub.s32 0, %v880
    %v882 = vrot.slane %v798, %v881
    %883 = vrot.lane.b32.xlu0 %v882, 8
    %v884 = vpop.permute.xlu0 %883
    %886 = vrot.lane.b32.xlu0 %v882, 16
    %v887 = vpop.permute.xlu0 %886
    %889 = vrot.lane.b32.xlu0 %v882, 24
    %v890 = vpop.permute.xlu0 %889
    %892 = vrot.lane.b32.xlu0 %v882, 32
    %v893 = vpop.permute.xlu0 %892
    %895 = vrot.lane.b32.xlu0 %v882, 40
    %v896 = vpop.permute.xlu0 %895
    %898 = vrot.lane.b32.xlu0 %v882, 48
    %v899 = vpop.permute.xlu0 %898
    %901 = vrot.lane.b32.xlu0 %v882, 56
    %v902 = vpop.permute.xlu0 %901
    %904 = vrot.lane.b32.xlu0 %v882, 64
    %v905 = vpop.permute.xlu0 %904
    %907 = vrot.lane.b32.xlu0 %v882, 72
    %v908 = vpop.permute.xlu0 %907
    %910 = vrot.lane.b32.xlu0 %v882, 80
    %v911 = vpop.permute.xlu0 %910
    %913 = vrot.lane.b32.xlu0 %v882, 88
    %v914 = vpop.permute.xlu0 %913
    %916 = vrot.lane.b32.xlu0 %v882, 96
    %v917 = vpop.permute.xlu0 %916
    %919 = vrot.lane.b32.xlu0 %v882, 104
    %v920 = vpop.permute.xlu0 %919
    %922 = vrot.lane.b32.xlu0 %v882, 112
    %v923 = vpop.permute.xlu0 %922
    %925 = vrot.lane.b32.xlu0 %v882, 120
    %v926 = vpop.permute.xlu0 %925
    %v928 = vsel %vm849, %v798, %v884
    %v929 = vsel %vm851, %v928, %v887
    %v930 = vsel %vm853, %v929, %v890
    %v931 = vsel %vm855, %v930, %v893
    %v932 = vsel %vm857, %v931, %v896
    %v933 = vsel %vm859, %v932, %v899
    %v934 = vsel %vm861, %v933, %v902
    %v935 = vsel %vm336, %v934, %v905
    %v936 = vsel %vm864, %v935, %v908
    %v937 = vsel %vm866, %v936, %v911
    %v938 = vsel %vm868, %v937, %v914
    %v939 = vsel %vm870, %v938, %v917
    %v940 = vsel %vm872, %v939, %v920
    %v941 = vsel %vm874, %v940, %v923
    %v942 = vsel %vm876, %v941, %v926
    %v943 = vlaneseq
    %v944 = vshrl.u32 %v943, 7
    %v945 = vsub.s32 0, %v944
    %v946 = vrot.slane %v877, %v945
    %v947 = vmul.f32 %v670, %v946
    %v948 = vmul.f32 %v671, %v946
    %v949 = vmul.f32 %v672, %v946
    %v950 = vmul.f32 %v673, %v946
    %v951 = vlaneseq
    %v952 = vshrl.u32 %v951, 7
    %v953 = vsub.s32 0, %v952
    %v954 = vrot.slane %v942, %v953
    %v955 = vadd.f32 %v947, %v954
    %v956 = vadd.f32 %v948, %v954
    %v957 = vadd.f32 %v949, %v954
    %v958 = vadd.f32 %v950, %v954
    %v959 = vmax.f32 %v955, 0.0
    %v960 = vmax.f32 %v956, 0.0
    %v961 = vmax.f32 %v957, 0.0
    %v962 = vmax.f32 %v958, 0.0
    %963 = vst [vmem:[#allocation3] sm:$0x1] 0.0
    %964 = vst [vmem:[#allocation3 + $0x18] sm:$0x1] 0.0
    %965 = vst [vmem:[#allocation3 + $0x11] sm:$0x1] 0.0
    %966 = vst [vmem:[#allocation3 + $0x29] sm:$0x1] 0.0
    %967 = vst [vmem:[#allocation3 + $0x1] sm:$0xff] %v959
    %968 = vst [vmem:[#allocation3 + $0x9] sm:$0xff] %v960
    %969 = vst [vmem:[#allocation3 + $0x19] sm:$0xff] %v961
    %970 = vst [vmem:[#allocation3 + $0x21] sm:$0xff] %v962
    %v971 = vld [vmem:[#allocation3] sm:$0xff]
    %v972 = vld [vmem:[#allocation3 + $0x8] sm:$0xff]
    %v973 = vld [vmem:[#allocation3 + $0x18] sm:$0xff]
    %v974 = vld [vmem:[#allocation3 + $0x20] sm:$0xff]
    %v975 = vld [vmem:[#allocation9] sm:$0xff]
    %v976 = vld [vmem:[#allocation9 + $0x8] sm:$0xff]
    %v977 = vld [vmem:[#allocation9 + $0x10] sm:$0xff]
    %v978 = vld [vmem:[#allocation9 + $0x18] sm:$0xff]
    %v979 = vld [vmem:[#allocation9 + $0x20] sm:$0xff]
    %v980 = vld [vmem:[#allocation9 + $0x28] sm:$0xff]
    %v981 = vld [vmem:[#allocation9 + $0x30] sm:$0xff]
    %v982 = vld [vmem:[#allocation9 + $0x38] sm:$0xff]
    %v983 = vld [vmem:[#allocation9 + $0x40] sm:$0xff]
    %v984 = vld [vmem:[#allocation9 + $0x48] sm:$0xff]
    %v985 = vld [vmem:[#allocation9 + $0x50] sm:$0xff]
    %v986 = vld [vmem:[#allocation9 + $0x58] sm:$0xff]
    %v987 = vld [vmem:[#allocation9 + $0x60] sm:$0xff]
    %v988 = vld [vmem:[#allocation9 + $0x68] sm:$0xff]
    %v989 = vld [vmem:[#allocation9 + $0x70] sm:$0xff]
    %v990 = vld [vmem:[#allocation9 + $0x78] sm:$0xff]
    %v991 = vld [vmem:[#allocation3 + $0x1] sm:$0xff]
    %v992 = vld [vmem:[#allocation3 + $0x9] sm:$0xff]
    %v993 = vld [vmem:[#allocation3 + $0x19] sm:$0xff]
    %v994 = vld [vmem:[#allocation3 + $0x21] sm:$0xff]
    %s995 = scalar_lea.vmem [#allocation9], 128
    %v996 = vld [vmem:[%s995] sm:$0xff]
    %v997 = vld [vmem:[%s995 + $0x8] sm:$0xff]
    %v998 = vld [vmem:[%s995 + $0x10] sm:$0xff]
    %v999 = vld [vmem:[%s995 + $0x18] sm:$0xff]
    %v1000 = vld [vmem:[%s995 + $0x20] sm:$0xff]
    %v1001 = vld [vmem:[%s995 + $0x28] sm:$0xff]
    %v1002 = vld [vmem:[%s995 + $0x30] sm:$0xff]
    %v1003 = vld [vmem:[%s995 + $0x38] sm:$0xff]
    %v1004 = vld [vmem:[%s995 + $0x40] sm:$0xff]
    %v1005 = vld [vmem:[%s995 + $0x48] sm:$0xff]
    %v1006 = vld [vmem:[%s995 + $0x50] sm:$0xff]
    %v1007 = vld [vmem:[%s995 + $0x58] sm:$0xff]
    %v1008 = vld [vmem:[%s995 + $0x60] sm:$0xff]
    %v1009 = vld [vmem:[%s995 + $0x68] sm:$0xff]
    %v1010 = vld [vmem:[%s995 + $0x70] sm:$0xff]
    %v1011 = vld [vmem:[%s995 + $0x78] sm:$0xff]
    %1012 = vmatprep.subr.mxu0 0.0
    %1013 = vmatpush1.msra.mxu0 %v996
    %1014 = vmatprep.subr.mxu0 0.0
    %1015 = vmatpush1.msra.mxu0 %v997
    %1016 = vmatprep.subr.mxu0 0.0
    %1017 = vmatpush1.msra.mxu0 %v998
    %1018 = vmatprep.subr.mxu0 0.0
    %1019 = vmatpush1.msra.mxu0 %v999
    %1020 = vmatprep.subr.mxu0 0.0
    %1021 = vmatpush1.msra.mxu0 %v1000
    %1022 = vmatprep.subr.mxu0 0.0
    %1023 = vmatpush1.msra.mxu0 %v1001
    %1024 = vmatprep.subr.mxu0 0.0
    %1025 = vmatpush1.msra.mxu0 %v1002
    %1026 = vmatprep.subr.mxu0 0.0
    %1027 = vmatpush1.msra.mxu0 %v1003
    %1028 = vmatprep.subr.mxu0 0.0
    %1029 = vmatpush1.msra.mxu0 %v1004
    %1030 = vmatprep.subr.mxu0 0.0
    %1031 = vmatpush1.msra.mxu0 %v1005
    %1032 = vmatprep.subr.mxu0 0.0
    %1033 = vmatpush1.msra.mxu0 %v1006
    %1034 = vmatprep.subr.mxu0 0.0
    %1035 = vmatpush1.msra.mxu0 %v1007
    %1036 = vmatprep.subr.mxu0 0.0
    %1037 = vmatpush1.msra.mxu0 %v1008
    %1038 = vmatprep.subr.mxu0 0.0
    %1039 = vmatpush1.msra.mxu0 %v1009
    %1040 = vmatprep.subr.mxu0 0.0
    %1041 = vmatpush1.msra.mxu0 %v1010
    %1042 = vmatprep.subr.mxu0 0.0
    %1043 = vmatpush1.msra.mxu0 %v1011
    %1044 = vmatprep.subr.mxu0 0.0
    %1045 = vmatpush1.msra.mxu0 0.0
    %1046 = vmatprep.subr.mxu0 0.0
    %1047 = vmatpush1.msra.mxu0 0.0
    %1048 = vmatprep.subr.mxu0 0.0
    %1049 = vmatpush1.msra.mxu0 0.0
    %1050 = vmatprep.subr.mxu0 0.0
    %1051 = vmatpush1.msra.mxu0 0.0
    %1052 = vmatprep.subr.mxu0 0.0
    %1053 = vmatpush1.msra.mxu0 0.0
    %1054 = vmatprep.subr.mxu0 0.0
    %1055 = vmatpush1.msra.mxu0 0.0
    %1056 = vmatprep.subr.mxu0 0.0
    %1057 = vmatpush1.msra.mxu0 0.0
    %1058 = vmatprep.subr.mxu0 0.0
    %1059 = vmatpush1.msra.mxu0 0.0
    %1060 = vmatprep.subr.mxu0 0.0
    %1061 = vmatpush1.msra.mxu0 0.0
    %1062 = vmatprep.subr.mxu0 0.0
    %1063 = vmatpush1.msra.mxu0 0.0
    %1064 = vmatprep.subr.mxu0 0.0
    %1065 = vmatpush1.msra.mxu0 0.0
    %1066 = vmatprep.subr.mxu0 0.0
    %1067 = vmatpush1.msra.mxu0 0.0
    %1068 = vmatprep.subr.mxu0 0.0
    %1069 = vmatpush1.msra.mxu0 0.0
    %1070 = vmatprep.subr.mxu0 0.0
    %1071 = vmatpush1.msra.mxu0 0.0
    %1072 = vmatprep.subr.mxu0 0.0
    %1073 = vmatpush1.msra.mxu0 0.0
    %1074 = vmatprep.subr.mxu0 0.0
    %1075 = vmatpush1.msra.mxu0 0.0
    %1076 = vmatprep.mubr.f32.mxu0 0.0
    %1077 = vmatmul.mubr.f32.gmra.mrb[0].mxu0 %v991
    %v1078 = vpop.f32.mrb[0].mxu0
    %v1079 = vadd.f32 0.0, %v1078
    %v1080 = vpop.f32.mrb[0].mxu0
    %1081 = vmatprep.mubr.f32.mxu0 0.0
    %1082 = vmatmul.mubr.f32.gmra.mrb[0].mxu0 %v992
    %v1083 = vpop.f32.mrb[0].mxu0
    %v1084 = vadd.f32 0.0, %v1083
    %v1085 = vpop.f32.mrb[0].mxu0
    %1086 = vmatprep.mubr.f32.mxu0 0.0
    %1087 = vmatmul.mubr.f32.gmra.mrb[0].mxu0 %v993
    %v1088 = vpop.f32.mrb[0].mxu0
    %v1089 = vadd.f32 0.0, %v1088
    %v1090 = vpop.f32.mrb[0].mxu0
    %1091 = vmatprep.mubr.f32.mxu0 0.0
    %1092 = vmatmul.mubr.f32.gmra.mrb[0].mxu0 %v994
    %v1093 = vpop.f32.mrb[0].mxu0
    %v1094 = vadd.f32 0.0, %v1093
    %v1095 = vpop.f32.mrb[0].mxu0
    %1096 = vdwg.mxu0
    %1097 = vmatprep.subr.mxu0 0.0
    %1098 = vmatpush1.msra.mxu0 %v975
    %1099 = vmatprep.subr.mxu0 0.0
    %1100 = vmatpush1.msra.mxu0 %v976
    %1101 = vmatprep.subr.mxu0 0.0
    %1102 = vmatpush1.msra.mxu0 %v977
    %1103 = vmatprep.subr.mxu0 0.0
    %1104 = vmatpush1.msra.mxu0 %v978
    %1105 = vmatprep.subr.mxu0 0.0
    %1106 = vmatpush1.msra.mxu0 %v979
    %1107 = vmatprep.subr.mxu0 0.0
    %1108 = vmatpush1.msra.mxu0 %v980
    %1109 = vmatprep.subr.mxu0 0.0
    %1110 = vmatpush1.msra.mxu0 %v981
    %1111 = vmatprep.subr.mxu0 0.0
    %1112 = vmatpush1.msra.mxu0 %v982
    %1113 = vmatprep.subr.mxu0 0.0
    %1114 = vmatpush1.msra.mxu0 %v983
    %1115 = vmatprep.subr.mxu0 0.0
    %1116 = vmatpush1.msra.mxu0 %v984
    %1117 = vmatprep.subr.mxu0 0.0
    %1118 = vmatpush1.msra.mxu0 %v985
    %1119 = vmatprep.subr.mxu0 0.0
    %1120 = vmatpush1.msra.mxu0 %v986
    %1121 = vmatprep.subr.mxu0 0.0
    %1122 = vmatpush1.msra.mxu0 %v987
    %1123 = vmatprep.subr.mxu0 0.0
    %1124 = vmatpush1.msra.mxu0 %v988
    %1125 = vmatprep.subr.mxu0 0.0
    %1126 = vmatpush1.msra.mxu0 %v989
    %1127 = vmatprep.subr.mxu0 0.0
    %1128 = vmatpush1.msra.mxu0 %v990
    %1129 = vmatprep.subr.mxu0 0.0
    %1130 = vmatpush1.msra.mxu0 0.0
    %1131 = vmatprep.subr.mxu0 0.0
    %1132 = vmatpush1.msra.mxu0 0.0
    %1133 = vmatprep.subr.mxu0 0.0
    %1134 = vmatpush1.msra.mxu0 0.0
    %1135 = vmatprep.subr.mxu0 0.0
    %1136 = vmatpush1.msra.mxu0 0.0
    %1137 = vmatprep.subr.mxu0 0.0
    %1138 = vmatpush1.msra.mxu0 0.0
    %1139 = vmatprep.subr.mxu0 0.0
    %1140 = vmatpush1.msra.mxu0 0.0
    %1141 = vmatprep.subr.mxu0 0.0
    %1142 = vmatpush1.msra.mxu0 0.0
    %1143 = vmatprep.subr.mxu0 0.0
    %1144 = vmatpush1.msra.mxu0 0.0
    %1145 = vmatprep.subr.mxu0 0.0
    %1146 = vmatpush1.msra.mxu0 0.0
    %1147 = vmatprep.subr.mxu0 0.0
    %1148 = vmatpush1.msra.mxu0 0.0
    %1149 = vmatprep.subr.mxu0 0.0
    %1150 = vmatpush1.msra.mxu0 0.0
    %1151 = vmatprep.subr.mxu0 0.0
    %1152 = vmatpush1.msra.mxu0 0.0
    %1153 = vmatprep.subr.mxu0 0.0
    %1154 = vmatpush1.msra.mxu0 0.0
    %1155 = vmatprep.subr.mxu0 0.0
    %1156 = vmatpush1.msra.mxu0 0.0
    %1157 = vmatprep.subr.mxu0 0.0
    %1158 = vmatpush1.msra.mxu0 0.0
    %1159 = vmatprep.subr.mxu0 0.0
    %1160 = vmatpush1.msra.mxu0 0.0
    %1161 = vmatprep.mubr.f32.mxu0 0.0
    %1162 = vmatmul.mubr.f32.gmra.mrb[0].mxu0 %v971
    %v1163 = vpop.f32.mrb[0].mxu0
    %v1164 = vadd.f32 %v1079, %v1163
    %v1165 = vpop.f32.mrb[0].mxu0
    %1166 = vmatprep.mubr.f32.mxu0 0.0
    %1167 = vmatmul.mubr.f32.gmra.mrb[0].mxu0 %v972
    %v1168 = vpop.f32.mrb[0].mxu0
    %v1169 = vadd.f32 %v1084, %v1168
    %v1170 = vpop.f32.mrb[0].mxu0
    %1171 = vmatprep.mubr.f32.mxu0 0.0
    %1172 = vmatmul.mubr.f32.gmra.mrb[0].mxu0 %v973
    %v1173 = vpop.f32.mrb[0].mxu0
    %v1174 = vadd.f32 %v1089, %v1173
    %v1175 = vpop.f32.mrb[0].mxu0
    %1176 = vmatprep.mubr.f32.mxu0 0.0
    %1177 = vmatmul.mubr.f32.gmra.mrb[0].mxu0 %v974
    %v1178 = vpop.f32.mrb[0].mxu0
    %v1179 = vadd.f32 %v1094, %v1178
    %v1180 = vpop.f32.mrb[0].mxu0
    %1181 = vdwg.mxu0
    %v1182 = vld [vmem:[#allocation3 + $0x2] sm:$0xff]
    %v1183 = vld [vmem:[#allocation3 + $0xa] sm:$0xff]
    %v1184 = vld [vmem:[#allocation3 + $0x1a] sm:$0xff]
    %v1185 = vld [vmem:[#allocation3 + $0x22] sm:$0xff]
    %s1186 = scalar_lea.vmem [#allocation9], 256
    %v1187 = vld [vmem:[%s1186] sm:$0xff]
    %v1188 = vld [vmem:[%s1186 + $0x8] sm:$0xff]
    %v1189 = vld [vmem:[%s1186 + $0x10] sm:$0xff]
    %v1190 = vld [vmem:[%s1186 + $0x18] sm:$0xff]
    %v1191 = vld [vmem:[%s1186 + $0x20] sm:$0xff]
    %v1192 = vld [vmem:[%s1186 + $0x28] sm:$0xff]
    %v1193 = vld [vmem:[%s1186 + $0x30] sm:$0xff]
    %v1194 = vld [vmem:[%s1186 + $0x38] sm:$0xff]
    %v1195 = vld [vmem:[%s1186 + $0x40] sm:$0xff]
    %v1196 = vld [vmem:[%s1186 + $0x48] sm:$0xff]
    %v1197 = vld [vmem:[%s1186 + $0x50] sm:$0xff]
    %v1198 = vld [vmem:[%s1186 + $0x58] sm:$0xff]
    %v1199 = vld [vmem:[%s1186 + $0x60] sm:$0xff]
    %v1200 = vld [vmem:[%s1186 + $0x68] sm:$0xff]
    %v1201 = vld [vmem:[%s1186 + $0x70] sm:$0xff]
    %v1202 = vld [vmem:[%s1186 + $0x78] sm:$0xff]
    %1203 = vmatprep.subr.mxu0 0.0
    %1204 = vmatpush1.msra.mxu0 %v1187
    %1205 = vmatprep.subr.mxu0 0.0
    %1206 = vmatpush1.msra.mxu0 %v1188
    %1207 = vmatprep.subr.mxu0 0.0
    %1208 = vmatpush1.msra.mxu0 %v1189
    %1209 = vmatprep.subr.mxu0 0.0
    %1210 = vmatpush1.msra.mxu0 %v1190
    %1211 = vmatprep.subr.mxu0 0.0
    %1212 = vmatpush1.msra.mxu0 %v1191
    %1213 = vmatprep.subr.mxu0 0.0
    %1214 = vmatpush1.msra.mxu0 %v1192
    %1215 = vmatprep.subr.mxu0 0.0
    %1216 = vmatpush1.msra.mxu0 %v1193
    %1217 = vmatprep.subr.mxu0 0.0
    %1218 = vmatpush1.msra.mxu0 %v1194
    %1219 = vmatprep.subr.mxu0 0.0
    %1220 = vmatpush1.msra.mxu0 %v1195
    %1221 = vmatprep.subr.mxu0 0.0
    %1222 = vmatpush1.msra.mxu0 %v1196
    %1223 = vmatprep.subr.mxu0 0.0
    %1224 = vmatpush1.msra.mxu0 %v1197
    %1225 = vmatprep.subr.mxu0 0.0
    %1226 = vmatpush1.msra.mxu0 %v1198
    %1227 = vmatprep.subr.mxu0 0.0
    %1228 = vmatpush1.msra.mxu0 %v1199
    %1229 = vmatprep.subr.mxu0 0.0
    %1230 = vmatpush1.msra.mxu0 %v1200
    %1231 = vmatprep.subr.mxu0 0.0
    %1232 = vmatpush1.msra.mxu0 %v1201
    %1233 = vmatprep.subr.mxu0 0.0
    %1234 = vmatpush1.msra.mxu0 %v1202
    %1235 = vmatprep.subr.mxu0 0.0
    %1236 = vmatpush1.msra.mxu0 0.0
    %1237 = vmatprep.subr.mxu0 0.0
    %1238 = vmatpush1.msra.mxu0 0.0
    %1239 = vmatprep.subr.mxu0 0.0
    %1240 = vmatpush1.msra.mxu0 0.0
    %1241 = vmatprep.subr.mxu0 0.0
    %1242 = vmatpush1.msra.mxu0 0.0
    %1243 = vmatprep.subr.mxu0 0.0
    %1244 = vmatpush1.msra.mxu0 0.0
    %1245 = vmatprep.subr.mxu0 0.0
    %1246 = vmatpush1.msra.mxu0 0.0
    %1247 = vmatprep.subr.mxu0 0.0
    %1248 = vmatpush1.msra.mxu0 0.0
    %1249 = vmatprep.subr.mxu0 0.0
    %1250 = vmatpush1.msra.mxu0 0.0
    %1251 = vmatprep.subr.mxu0 0.0
    %1252 = vmatpush1.msra.mxu0 0.0
    %1253 = vmatprep.subr.mxu0 0.0
    %1254 = vmatpush1.msra.mxu0 0.0
    %1255 = vmatprep.subr.mxu0 0.0
    %1256 = vmatpush1.msra.mxu0 0.0
    %1257 = vmatprep.subr.mxu0 0.0
    %1258 = vmatpush1.msra.mxu0 0.0
    %1259 = vmatprep.subr.mxu0 0.0
    %1260 = vmatpush1.msra.mxu0 0.0
    %1261 = vmatprep.subr.mxu0 0.0
    %1262 = vmatpush1.msra.mxu0 0.0
    %1263 = vmatprep.subr.mxu0 0.0
    %1264 = vmatpush1.msra.mxu0 0.0
    %1265 = vmatprep.subr.mxu0 0.0
    %1266 = vmatpush1.msra.mxu0 0.0
    %1267 = vmatprep.mubr.f32.mxu0 0.0
    %1268 = vmatmul.mubr.f32.gmra.mrb[0].mxu0 %v1182
    %v1269 = vpop.f32.mrb[0].mxu0
    %v1270 = vadd.f32 0.0, %v1269
    %v1271 = vpop.f32.mrb[0].mxu0
    %1272 = vmatprep.mubr.f32.mxu0 0.0
    %1273 = vmatmul.mubr.f32.gmra.mrb[0].mxu0 %v1183
    %v1274 = vpop.f32.mrb[0].mxu0
    %v1275 = vadd.f32 0.0, %v1274
    %v1276 = vpop.f32.mrb[0].mxu0
    %1277 = vmatprep.mubr.f32.mxu0 0.0
    %1278 = vmatmul.mubr.f32.gmra.mrb[0].mxu0 %v1184
    %v1279 = vpop.f32.mrb[0].mxu0
    %v1280 = vadd.f32 0.0, %v1279
    %v1281 = vpop.f32.mrb[0].mxu0
    %1282 = vmatprep.mubr.f32.mxu0 0.0
    %1283 = vmatmul.mubr.f32.gmra.mrb[0].mxu0 %v1185
    %v1284 = vpop.f32.mrb[0].mxu0
    %v1285 = vadd.f32 0.0, %v1284
    %v1286 = vpop.f32.mrb[0].mxu0
    %1287 = vdwg.mxu0
    %v1288 = vadd.f32 %v1164, %v1270
    %v1289 = vadd.f32 %v1169, %v1275
    %v1290 = vadd.f32 %v1174, %v1280
    %v1291 = vadd.f32 %v1179, %v1285
    %v1292 = vadd.f32 %v1288, %v1289
    %v1293 = vadd.f32 %v1292, %v1290
    %v1294 = vadd.f32 %v1293, %v1291
    %v1295 = vrot.slane %v1294, 4
    %v1296 = vadd.f32 %v1294, %v1295
    %v1297 = vrot.slane %v1296, 2
    %v1298 = vadd.f32 %v1296, %v1297
    %v1299 = vrot.slane %v1298, 1
    %v1300 = vadd.f32 %v1298, %v1299
    %v1301 = vmul.f32 %v1288, %v1288
    %v1302 = vmul.f32 %v1289, %v1289
    %v1303 = vmul.f32 %v1290, %v1290
    %v1304 = vmul.f32 %v1291, %v1291
    %v1305 = vadd.f32 %v1301, %v1302
    %v1306 = vadd.f32 %v1305, %v1303
    %v1307 = vadd.f32 %v1306, %v1304
    %v1308 = vrot.slane %v1307, 4
    %v1309 = vadd.f32 %v1307, %v1308
    %v1310 = vrot.slane %v1309, 2
    %v1311 = vadd.f32 %v1309, %v1310
    %v1312 = vrot.slane %v1311, 1
    %v1313 = vadd.f32 %v1311, %v1312
    %v1314 = vsel %vm696, %v1300, %v1313
    %1315 = vmatprep.subr.mxu0 0.0
    %1316 = vmatpush1.msra.mxu0 %v311
    %1317 = vmatprep.subr.mxu0 0.0
    %1318 = vmatpush1.msra.mxu0 %v312
    %1319 = vmatprep.subr.mxu0 0.0
    %1320 = vmatpush1.msra.mxu0 %v313
    %1321 = vmatprep.subr.mxu0 0.0
    %1322 = vmatpush1.msra.mxu0 %v314
    %1323 = vmatprep.subr.mxu0 0.0
    %1324 = vmatpush1.msra.mxu0 %v315
    %1325 = vmatprep.subr.mxu0 0.0
    %1326 = vmatpush1.msra.mxu0 %v316
    %1327 = vmatprep.subr.mxu0 0.0
    %1328 = vmatpush1.msra.mxu0 %v317
    %1329 = vmatprep.subr.mxu0 0.0
    %1330 = vmatpush1.msra.mxu0 %v318
    %1331 = vmatprep.subr.mxu0 0.0
    %1332 = vmatpush1.msra.mxu0 %v319
    %1333 = vmatprep.subr.mxu0 0.0
    %1334 = vmatpush1.msra.mxu0 %v320
    %1335 = vmatprep.subr.mxu0 0.0
    %1336 = vmatpush1.msra.mxu0 %v321
    %1337 = vmatprep.subr.mxu0 0.0
    %1338 = vmatpush1.msra.mxu0 %v322
    %1339 = vmatprep.subr.mxu0 0.0
    %1340 = vmatpush1.msra.mxu0 %v323
    %1341 = vmatprep.subr.mxu0 0.0
    %1342 = vmatpush1.msra.mxu0 %v324
    %1343 = vmatprep.subr.mxu0 0.0
    %1344 = vmatpush1.msra.mxu0 %v325
    %1345 = vmatprep.subr.mxu0 0.0
    %1346 = vmatpush1.msra.mxu0 %v326
    %1347 = vmatprep.subr.mxu0 0.0
    %1348 = vmatpush1.msra.mxu0 0.0
    %1349 = vmatprep.subr.mxu0 0.0
    %1350 = vmatpush1.msra.mxu0 0.0
    %1351 = vmatprep.subr.mxu0 0.0
    %1352 = vmatpush1.msra.mxu0 0.0
    %1353 = vmatprep.subr.mxu0 0.0
    %1354 = vmatpush1.msra.mxu0 0.0
    %1355 = vmatprep.subr.mxu0 0.0
    %1356 = vmatpush1.msra.mxu0 0.0
    %1357 = vmatprep.subr.mxu0 0.0
    %1358 = vmatpush1.msra.mxu0 0.0
    %1359 = vmatprep.subr.mxu0 0.0
    %1360 = vmatpush1.msra.mxu0 0.0
    %1361 = vmatprep.subr.mxu0 0.0
    %1362 = vmatpush1.msra.mxu0 0.0
    %1363 = vmatprep.subr.mxu0 0.0
    %1364 = vmatpush1.msra.mxu0 0.0
    %1365 = vmatprep.subr.mxu0 0.0
    %1366 = vmatpush1.msra.mxu0 0.0
    %1367 = vmatprep.subr.mxu0 0.0
    %1368 = vmatpush1.msra.mxu0 0.0
    %1369 = vmatprep.subr.mxu0 0.0
    %1370 = vmatpush1.msra.mxu0 0.0
    %1371 = vmatprep.subr.mxu0 0.0
    %1372 = vmatpush1.msra.mxu0 0.0
    %1373 = vmatprep.subr.mxu0 0.0
    %1374 = vmatpush1.msra.mxu0 0.0
    %1375 = vmatprep.subr.mxu0 0.0
    %1376 = vmatpush1.msra.mxu0 0.0
    %1377 = vmatprep.subr.mxu0 0.0
    %1378 = vmatpush1.msra.mxu0 0.0
    %1379 = vmatprep.mubr.f32.mxu0 0.0
    %1380 = vmatmul.mubr.f32.gmra.mrb[0].mxu0 %v1314
    %v1381 = vpop.f32.mrb[0].mxu0
    %v1382 = vadd.f32 0.0, %v1381
    %v1383 = vpop.f32.mrb[0].mxu0
    %1384 = vdwg.mxu0
    %v1385 = vmul.f32 %v1382, 0.001953125
    %v1386 = vmul.f32 %v1385, %v1385
    %v1388 = vrot.slane %v1386, 7
    %v1390 = vsub.f32 %v1385, %v1388
    %v1391 = vmax.f32 %v1390, 0.0
    %v1392 = vld [vmem:[%s5] sm:$0x1]
    %v1393 = vadd.f32 %v1391, 1e-05
    %v1394 = vrsqrt.pop %v1393
    %v1397 = vunpack.c.l.s4 1966171168
    %v1398 = vunpack.c.0.s8 %v1397
    %v1399 = vlaneseq
    %v1400 = vshrl.u32 %v1399, 7
    %v1401 = vsub.s32 %v1398, %v1400
    %v1402 = vrot.slane %v1394, %v1401
    %v1403 = vcombine.high %v1402, %v1402
    %v1405 = vunpack.c.l.s4 1966171168
    %v1406 = vunpack.c.0.s8 %v1405
    %v1407 = vlaneseq
    %v1408 = vshrl.u32 %v1407, 7
    %v1409 = vsub.s32 %v1406, %v1408
    %v1410 = vrot.slane %v1403, %v1409
    %v1412 = vmul.f32 %v1392, %v1410
    %v1413 = vld [vmem:[%s6] sm:$0x1]
    %v1414 = vmul.f32 %v1385, %v1412
    %v1415 = vsub.f32 %v1413, %v1414
    %v1417 = vlaneseq
    %v1418 = vshrl.u32 %v1417, 7
    %v1419 = vsub.s32 0, %v1418
    %v1420 = vrot.slane %v1412, %v1419
    %1421 = vrot.lane.b32.xlu0 %v1420, 8
    %v1422 = vpop.permute.xlu0 %1421
    %1424 = vrot.lane.b32.xlu0 %v1420, 16
    %v1425 = vpop.permute.xlu0 %1424
    %1427 = vrot.lane.b32.xlu0 %v1420, 24
    %v1428 = vpop.permute.xlu0 %1427
    %1430 = vrot.lane.b32.xlu0 %v1420, 32
    %v1431 = vpop.permute.xlu0 %1430
    %1433 = vrot.lane.b32.xlu0 %v1420, 40
    %v1434 = vpop.permute.xlu0 %1433
    %1436 = vrot.lane.b32.xlu0 %v1420, 48
    %v1437 = vpop.permute.xlu0 %1436
    %1439 = vrot.lane.b32.xlu0 %v1420, 56
    %v1440 = vpop.permute.xlu0 %1439
    %1442 = vrot.lane.b32.xlu0 %v1420, 64
    %v1443 = vpop.permute.xlu0 %1442
    %1445 = vrot.lane.b32.xlu0 %v1420, 72
    %v1446 = vpop.permute.xlu0 %1445
    %1448 = vrot.lane.b32.xlu0 %v1420, 80
    %v1449 = vpop.permute.xlu0 %1448
    %1451 = vrot.lane.b32.xlu0 %v1420, 88
    %v1452 = vpop.permute.xlu0 %1451
    %1454 = vrot.lane.b32.xlu0 %v1420, 96
    %v1455 = vpop.permute.xlu0 %1454
    %1457 = vrot.lane.b32.xlu0 %v1420, 104
    %v1458 = vpop.permute.xlu0 %1457
    %1460 = vrot.lane.b32.xlu0 %v1420, 112
    %v1461 = vpop.permute.xlu0 %1460
    %1463 = vrot.lane.b32.xlu0 %v1420, 120
    %v1464 = vpop.permute.xlu0 %1463
    %v1466 = vsel %vm849, %v1412, %v1422
    %v1467 = vsel %vm851, %v1466, %v1425
    %v1468 = vsel %vm853, %v1467, %v1428
    %v1469 = vsel %vm855, %v1468, %v1431
    %v1470 = vsel %vm857, %v1469, %v1434
    %v1471 = vsel %vm859, %v1470, %v1437
    %v1472 = vsel %vm861, %v1471, %v1440
    %v1473 = vsel %vm336, %v1472, %v1443
    %v1474 = vsel %vm864, %v1473, %v1446
    %v1475 = vsel %vm866, %v1474, %v1449
    %v1476 = vsel %vm868, %v1475, %v1452
    %v1477 = vsel %vm870, %v1476, %v1455
    %v1478 = vsel %vm872, %v1477, %v1458
    %v1479 = vsel %vm874, %v1478, %v1461
    %v1480 = vsel %vm876, %v1479, %v1464
    %v1482 = vlaneseq
    %v1483 = vshrl.u32 %v1482, 7
    %v1484 = vsub.s32 0, %v1483
    %v1485 = vrot.slane %v1415, %v1484
    %1486 = vrot.lane.b32.xlu0 %v1485, 8
    %v1487 = vpop.permute.xlu0 %1486
    %1489 = vrot.lane.b32.xlu0 %v1485, 16
    %v1490 = vpop.permute.xlu0 %1489
    %1492 = vrot.lane.b32.xlu0 %v1485, 24
    %v1493 = vpop.permute.xlu0 %1492
    %1495 = vrot.lane.b32.xlu0 %v1485, 32
    %v1496 = vpop.permute.xlu0 %1495
    %1498 = vrot.lane.b32.xlu0 %v1485, 40
    %v1499 = vpop.permute.xlu0 %1498
    %1501 = vrot.lane.b32.xlu0 %v1485, 48
    %v1502 = vpop.permute.xlu0 %1501
    %1504 = vrot.lane.b32.xlu0 %v1485, 56
    %v1505 = vpop.permute.xlu0 %1504
    %1507 = vrot.lane.b32.xlu0 %v1485, 64
    %v1508 = vpop.permute.xlu0 %1507
    %1510 = vrot.lane.b32.xlu0 %v1485, 72
    %v1511 = vpop.permute.xlu0 %1510
    %1513 = vrot.lane.b32.xlu0 %v1485, 80
    %v1514 = vpop.permute.xlu0 %1513
    %1516 = vrot.lane.b32.xlu0 %v1485, 88
    %v1517 = vpop.permute.xlu0 %1516
    %1519 = vrot.lane.b32.xlu0 %v1485, 96
    %v1520 = vpop.permute.xlu0 %1519
    %1522 = vrot.lane.b32.xlu0 %v1485, 104
    %v1523 = vpop.permute.xlu0 %1522
    %1525 = vrot.lane.b32.xlu0 %v1485, 112
    %v1526 = vpop.permute.xlu0 %1525
    %1528 = vrot.lane.b32.xlu0 %v1485, 120
    %v1529 = vpop.permute.xlu0 %1528
    %v1531 = vsel %vm849, %v1415, %v1487
    %v1532 = vsel %vm851, %v1531, %v1490
    %v1533 = vsel %vm853, %v1532, %v1493
    %v1534 = vsel %vm855, %v1533, %v1496
    %v1535 = vsel %vm857, %v1534, %v1499
    %v1536 = vsel %vm859, %v1535, %v1502
    %v1537 = vsel %vm861, %v1536, %v1505
    %v1538 = vsel %vm336, %v1537, %v1508
    %v1539 = vsel %vm864, %v1538, %v1511
    %v1540 = vsel %vm866, %v1539, %v1514
    %v1541 = vsel %vm868, %v1540, %v1517
    %v1542 = vsel %vm870, %v1541, %v1520
    %v1543 = vsel %vm872, %v1542, %v1523
    %v1544 = vsel %vm874, %v1543, %v1526
    %v1545 = vsel %vm876, %v1544, %v1529
    %v1546 = vlaneseq
    %v1547 = vshrl.u32 %v1546, 7
    %v1548 = vsub.s32 0, %v1547
    %v1549 = vrot.slane %v1480, %v1548
    %v1550 = vmul.f32 %v1288, %v1549
    %v1551 = vmul.f32 %v1289, %v1549
    %v1552 = vmul.f32 %v1290, %v1549
    %v1553 = vmul.f32 %v1291, %v1549
    %v1554 = vlaneseq
    %v1555 = vshrl.u32 %v1554, 7
    %v1556 = vsub.s32 0, %v1555
    %v1557 = vrot.slane %v1545, %v1556
    %v1558 = vadd.f32 %v1550, %v1557
    %v1559 = vadd.f32 %v1551, %v1557
    %v1560 = vadd.f32 %v1552, %v1557
    %v1561 = vadd.f32 %v1553, %v1557
    %v1562 = vmax.f32 %v1558, 0.0
    %v1563 = vmax.f32 %v1559, 0.0
    %v1564 = vmax.f32 %v1560, 0.0
    %v1565 = vmax.f32 %v1561, 0.0
    %1566 = vst [vmem:[#allocation10] sm:$0xff] %v1562
    %1567 = vst [vmem:[#allocation10 + $0x8] sm:$0xff] %v1563
    %1568 = vst [vmem:[#allocation10 + $0x10] sm:$0xff] %v1564
    %1569 = vst [vmem:[#allocation10 + $0x18] sm:$0xff] %v1565
    // Predicated region
    $region42: #{tpu_custom_call.1} parent=1 // pred_check
      _
    $region43: #{tpu_custom_call.1} parent=1 // pred_check_branch
      %1571 = sbr.rel (0) target = $region45
    $region44: #{tpu_custom_call.1} parent=1 // pred_region
      %s1573 = ssub.s32 512, 512
      %1574 = vsyncadd [#allocation6], %s1573
      %s1575 = sshll.u32 [#allocation10], 4
      %s1576 = int_to_ptr.vmem [resolvable:$true] %s1575
      %1581 = dma.vmem_to_hbm [thread:$0]  %s1576, 512, %s7, [#allocation6], 128, 128, 8
    $region45: #{tpu_custom_call.1} parent=1 // pred_fallthru
      _
    // Predicated region
    $region46: #{tpu_custom_call.1} parent=1 // pred_check
      _
    $region47: #{tpu_custom_call.1} parent=1 // pred_check_branch
      %1583 = sbr.rel (0) target = $region49
    $region48: #{tpu_custom_call.1} parent=1 // pred_region
      %1584 = dma.done [#allocation6], 512
    $region49: #{tpu_custom_call.1} parent=1 // pred_fallthru
      _
    %1585 = vsyncpa [#allocation5], 1
    %1586 = vsyncpa [#allocation8], 1
    %1587 = vsyncpa [#allocation6], 1

</llo_original>
